<compile_context>
chip_gen: v5e
topology: v5e:2x2
jax: 0.10.0
libtpu: 0.0.40
codegen_flags: <defaults>
</compile_context>

<pallas_src>
import functools

import jax
import jax.numpy as jnp
from jax.experimental import pallas as pl
from jax.experimental.pallas import tpu as pltpu


# ----------------------------- in-kernel helpers -----------------------------

def _layernorm(x, g, b, eps=1e-5):
    # CLIP's LayerNorm always runs its statistics in float32.
    x = x.astype(jnp.float32)
    mu = jnp.mean(x, axis=-1, keepdims=True)
    var = jnp.mean(jnp.square(x - mu), axis=-1, keepdims=True)
    return (x - mu) * jax.lax.rsqrt(var + eps) * g + b


# ------------------------------- Pallas kernels -------------------------------

def transformer_kernel(x_ref, ln1_g_ref, ln1_b_ref, qkv_w_ref, qkv_b_ref,
                       out_w_ref, out_b_ref, ln2_g_ref, ln2_b_ref,
                       fc_w_ref, fc_b_ref, proj_w_ref, proj_b_ref,
                       o_ref, acc_ref, *, n_head):
    """One (batch b, layer l) grid step of the fused transformer stack."""
    l = pl.program_id(1)

    # Layer 0: load this batch element's activation into the resident scratch.
    @pl.when(l == 0)
    def _():
        acc_ref[...] = x_ref[0]

    x = acc_ref[...]                              # (S, D) f32 residual stream
    S, D = x.shape
    hd = D // n_head
    scale = hd ** -0.5

    # Causal mask built in-kernel (no (S,S) DMA). Large finite negative instead
    # of -inf so padded query rows stay finite.
    rows = jax.lax.broadcasted_iota(jnp.int32, (S, S), 0)
    cols = jax.lax.broadcasted_iota(jnp.int32, (S, S), 1)
    mask = jnp.where(cols <= rows, jnp.float32(0.0), jnp.float32(-1e9))

    # ---------------- multi-head self-attention (pre-LN) ----------------
    xn = _layernorm(x, ln1_g_ref[0], ln1_b_ref[0]).astype(jnp.bfloat16)
    # Single wide in_proj GEMM; weight pre-transposed to (D, 3D), bf16.
    qkv = jnp.dot(xn, qkv_w_ref[0],
                  preferred_element_type=jnp.float32) + qkv_b_ref[0]   # (S, 3D) f32

    attn = jnp.zeros((S, D), jnp.float32)
    for h in range(n_head):
        qh = (qkv[:, h * hd:(h + 1) * hd] * scale).astype(jnp.bfloat16)
        kh = qkv[:, D + h * hd:D + (h + 1) * hd].astype(jnp.bfloat16)
        vh = qkv[:, 2 * D + h * hd:2 * D + (h + 1) * hd].astype(jnp.bfloat16)
        # q @ k.T without an explicit transpose op (contract last dims).
        s = jax.lax.dot_general(qh, kh, (((1,), (1,)), ((), ())),
                                preferred_element_type=jnp.float32) + mask
        s = s - jnp.max(s, axis=-1, keepdims=True)          # f32 softmax
        p = jnp.exp(s)
        p = p * pl.reciprocal(jnp.sum(p, axis=-1, keepdims=True), approx=True)
        ctx = jnp.dot(p.astype(jnp.bfloat16), vh,
                      preferred_element_type=jnp.float32)    # (S, hd)
        # Head recombination as MXU accumulation (out_w pre-split to (H,hd,D));
        # replaces jnp.concatenate(heads) + full (D,D) transpose.
        attn = attn + jnp.dot(ctx.astype(jnp.bfloat16), out_w_ref[0, h],
                              preferred_element_type=jnp.float32)
    x = x + attn + out_b_ref[0]

    # ---------------- MLP (pre-LN), QuickGELU ----------------
    # TODO(synk): at very large D (f32 weights) tile the 4D hidden dim with an
    # extra K grid axis for v7x's 64 MiB VMEM; bf16 weights fit as-is here.
    xn2 = _layernorm(x, ln2_g_ref[0], ln2_b_ref[0]).astype(jnp.bfloat16)
    hdn = jnp.dot(xn2, fc_w_ref[0],
                  preferred_element_type=jnp.float32) + fc_b_ref[0]
    hdn = hdn * jax.nn.sigmoid(1.702 * hdn)                  # QuickGELU (f32)
    m = jnp.dot(hdn.astype(jnp.bfloat16), proj_w_ref[0],
                preferred_element_type=jnp.float32) + proj_b_ref[0]
    x = x + m

    acc_ref[...] = x                                         # stays VMEM-resident

    @pl.when(l == pl.num_programs(1) - 1)
    def _():
        o_ref[0] = x                                         # write once per b


def head_kernel(x_ref, g_ref, b_ref, proj_ref, o_ref):
    # x: (B, D) gathered EOT rows; proj: (D, E)
    xn = _layernorm(x_ref[...], g_ref[...], b_ref[...])
    o_ref[...] = jnp.dot(xn, proj_ref[...], preferred_element_type=jnp.float32)


# ------------------------------- wrappers -------------------------------

def transformer_stack(x, P, n_head):
    """All L residual attention blocks in a single pallas_call."""
    B, S, D = x.shape
    L = P["qkv_w"].shape[0]

    def wspec(shape):
        # Stacked per-layer tensor: pick layer l's slab, ignore the batch index.
        nzeros = len(shape) - 1
        return pl.BlockSpec((1,) + tuple(shape[1:]),
                            lambda b, l: (l,) + (0,) * nzeros)

    return pl.pallas_call(
        functools.partial(transformer_kernel, n_head=n_head),
        out_shape=jax.ShapeDtypeStruct((B, S, D), jnp.float32),
        grid=(B, L),
        in_specs=[
            pl.BlockSpec((1, S, D), lambda b, l: (b, 0, 0)),
            wspec(P["ln1_g"].shape), wspec(P["ln1_b"].shape),
            wspec(P["qkv_w"].shape), wspec(P["qkv_b"].shape),
            wspec(P["out_w"].shape), wspec(P["out_b"].shape),
            wspec(P["ln2_g"].shape), wspec(P["ln2_b"].shape),
            wspec(P["fc_w"].shape), wspec(P["fc_b"].shape),
            wspec(P["proj_w"].shape), wspec(P["proj_b"].shape),
        ],
        out_specs=pl.BlockSpec((1, S, D), lambda b, l: (b, 0, 0)),
        scratch_shapes=[pltpu.VMEM((S, D), jnp.float32)],
        compiler_params=pltpu.CompilerParams(
            dimension_semantics=("parallel", "arbitrary"),
            vmem_limit_bytes=48 * 1024 * 1024),
    )(x, P["ln1_g"], P["ln1_b"], P["qkv_w"], P["qkv_b"],
      P["out_w"], P["out_b"], P["ln2_g"], P["ln2_b"],
      P["fc_w"], P["fc_b"], P["proj_w"], P["proj_b"])


def final_head(x_eot, ln_g, ln_b, text_projection):
    B, _ = x_eot.shape
    E = text_projection.shape[1]
    return pl.pallas_call(
        head_kernel,
        out_shape=jax.ShapeDtypeStruct((B, E), jnp.float32),
    )(x_eot, ln_g, ln_b, text_projection)


def clip_text_encode(tokens, params, n_head):
    """Equivalent of CLIPTEXT.encode_text on pre-tokenized int32 ids."""
    B, S = tokens.shape
    # nn.Embedding gather + positional add: plain-JAX glue (XLA fuses the add
    # into the gather; a dedicated elementwise kernel is pure launch overhead).
    x = (params["token_embedding"][tokens]
         + params["positional_embedding"][None, :S]).astype(jnp.float32)
    # Pad the sequence to a multiple of 8 sublanes; the causal mask guarantees
    # real rows never attend to padded keys, so results for real rows are exact.
    S_pad = ((S + 7) // 8) * 8
    if S_pad != S:
        x = jnp.pad(x, ((0, 0), (0, S_pad - S), (0, 0)))
    x = transformer_stack(x, params, n_head)                 # fused transformer
    eot = jnp.argmax(tokens, axis=-1)                        # text.argmax(-1)
    x_eot = x[jnp.arange(B), eot]                            # (B, D) gather glue
    return final_head(x_eot, params["ln_final_g"], params["ln_final_b"],
                      params["text_projection"])             # ln_final + proj


# ------------------------------- parameter init -------------------------------

def init_params(key, *, vocab_size, context_length, width, layers, heads, embed_dim):
    D, H = width, heads
    hd = D // H
    proj_std = (D ** -0.5) * ((2 * layers) ** -0.5)
    attn_std = D ** -0.5
    fc_std = (2 * D) ** -0.5

    keys = iter(jax.random.split(key, 3 + 4 * layers))
    nrm = lambda k, shape, std: std * jax.random.normal(k, shape, jnp.float32)

    qkv_w, out_w, fc_w, proj_w = [], [], [], []
    for _ in range(layers):
        w_in = nrm(next(keys), (3 * D, D), attn_std)     # in_proj_weight (3D, D)
        w_out = nrm(next(keys), (D, D), proj_std)        # out_proj.weight (D, D)
        w_fc = nrm(next(keys), (4 * D, D), fc_std)       # c_fc.weight   (4D, D)
        w_pr = nrm(next(keys), (D, 4 * D), proj_std)     # c_proj.weight (D, 4D)
        qkv_w.append(w_in.T)                             # pre-transposed (D, 3D)
        out_w.append(w_out.T.reshape(H, hd, D))          # pre-split     (H, hd, D)
        fc_w.append(w_fc.T)                              # pre-transposed (D, 4D)
        proj_w.append(w_pr.T)                            # pre-transposed (4D, D)

    bf16 = jnp.bfloat16
    return {
        "token_embedding": nrm(next(keys), (vocab_size, D), 0.02),
        "positional_embedding": nrm(next(keys), (context_length, D), 0.01),
        "ln_final_g": jnp.ones((1, D), jnp.float32),
        "ln_final_b": jnp.zeros((1, D), jnp.float32),
        "text_projection": nrm(next(keys), (D, embed_dim), D ** -0.5),
        # layer-stacked, bf16 matmul weights
        "qkv_w": jnp.stack(qkv_w).astype(bf16),                       # (L, D, 3D)
        "qkv_b": jnp.zeros((layers, 1, 3 * D), jnp.float32),
        "out_w": jnp.stack(out_w).astype(bf16),                       # (L, H, hd, D)
        "out_b": jnp.zeros((layers, 1, D), jnp.float32),
        "fc_w": jnp.stack(fc_w).astype(bf16),                         # (L, D, 4D)
        "fc_b": jnp.zeros((layers, 1, 4 * D), jnp.float32),
        "proj_w": jnp.stack(proj_w).astype(bf16),                     # (L, 4D, D)
        "proj_b": jnp.zeros((layers, 1, D), jnp.float32),
        "ln1_g": jnp.ones((layers, 1, D), jnp.float32),
        "ln1_b": jnp.zeros((layers, 1, D), jnp.float32),
        "ln2_g": jnp.ones((layers, 1, D), jnp.float32),
        "ln2_b": jnp.zeros((layers, 1, D), jnp.float32),
    }


# ------------------------------------ main ------------------------------------

if __name__ == "__main__":
    # Small, forward-consistent shapes.
    B, S = 2, 8            # batch, context_length
    D, H, L = 32, 4, 2     # transformer_width, heads, layers
    VOCAB, E = 64, 32      # vocab_size, embed_dim

    key = jax.random.PRNGKey(0)
    pkey, tkey = jax.random.split(key)
    params = init_params(pkey, vocab_size=VOCAB, context_length=S,
                         width=D, layers=L, heads=H, embed_dim=E)

    # deterministic synthetic "tokenized captions" (int32 token ids)
    tokens = jax.random.randint(tkey, (B, S), minval=1, maxval=VOCAB,
                                dtype=jnp.int32)

    feats = clip_text_encode(tokens, params, n_head=H)
    feats = jax.block_until_ready(feats)
    assert feats.shape == (B, E) and feats.dtype == jnp.float32
    assert bool(jnp.all(jnp.isfinite(feats)))
    print("KERNEL_OK")
</pallas_src>

<mosaic_0001>
module attributes {stable_mosaic.version = 11 : i64} {
  func.func @transformer_kernel(%arg0: i32, %arg1: i32, %arg2: memref<1x8x32xf32, #tpu.memory_space<vmem>>, %arg3: memref<1x1x32xf32, #tpu.memory_space<vmem>>, %arg4: memref<1x1x32xf32, #tpu.memory_space<vmem>>, %arg5: memref<1x32x96xbf16, #tpu.memory_space<vmem>>, %arg6: memref<1x1x96xf32, #tpu.memory_space<vmem>>, %arg7: memref<1x4x8x32xbf16, #tpu.memory_space<vmem>>, %arg8: memref<1x1x32xf32, #tpu.memory_space<vmem>>, %arg9: memref<1x1x32xf32, #tpu.memory_space<vmem>>, %arg10: memref<1x1x32xf32, #tpu.memory_space<vmem>>, %arg11: memref<1x32x128xbf16, #tpu.memory_space<vmem>>, %arg12: memref<1x1x128xf32, #tpu.memory_space<vmem>>, %arg13: memref<1x128x32xbf16, #tpu.memory_space<vmem>>, %arg14: memref<1x1x32xf32, #tpu.memory_space<vmem>>, %arg15: memref<1x8x32xf32, #tpu.memory_space<vmem>>, %arg16: memref<8x32xf32, #tpu.memory_space<vmem>>) attributes {dimension_semantics = [#tpu.dimension_semantics<parallel>, #tpu.dimension_semantics<arbitrary>], iteration_bounds = array<i64: 2, 2>, scalar_prefetch = 0 : i64, scratch_operands = 1 : i64, tpu.core_type = #tpu.core_type<tc>, window_params = [{transform_indices = @transform_0, window_bounds = array<i64: 1, 8, 32>}, {transform_indices = @transform_1, window_bounds = array<i64: 1, 1, 32>}, {transform_indices = @transform_2, window_bounds = array<i64: 1, 1, 32>}, {transform_indices = @transform_3, window_bounds = array<i64: 1, 32, 96>}, {transform_indices = @transform_4, window_bounds = array<i64: 1, 1, 96>}, {transform_indices = @transform_5, window_bounds = array<i64: 1, 4, 8, 32>}, {transform_indices = @transform_6, window_bounds = array<i64: 1, 1, 32>}, {transform_indices = @transform_7, window_bounds = array<i64: 1, 1, 32>}, {transform_indices = @transform_8, window_bounds = array<i64: 1, 1, 32>}, {transform_indices = @transform_9, window_bounds = array<i64: 1, 32, 128>}, {transform_indices = @transform_10, window_bounds = array<i64: 1, 1, 128>}, {transform_indices = @transform_11, window_bounds = array<i64: 1, 128, 32>}, {transform_indices = @transform_12, window_bounds = array<i64: 1, 1, 32>}, {transform_indices = @transform_13, window_bounds = array<i64: 1, 8, 32>}]} {
    %c0_i32 = arith.constant 0 : i32
    %0 = arith.cmpi eq, %arg1, %c0_i32 : i32
    %1 = arith.extui %0 : i1 to i32
    %c0_i32_0 = arith.constant 0 : i32
    %2 = arith.cmpi ne, %1, %c0_i32_0 : i32
    scf.if %2 {
      %c0_92 = arith.constant 0 : index
      %c0_93 = arith.constant 0 : index
      %c0_94 = arith.constant 0 : index
      %213 = vector.load %arg2[%c0_92, %c0_93, %c0_94] : memref<1x8x32xf32, #tpu.memory_space<vmem>>, vector<1x8x32xf32>
      %214 = vector.shape_cast %213 : vector<1x8x32xf32> to vector<8x32xf32>
      %c0_95 = arith.constant 0 : index
      %c0_96 = arith.constant 0 : index
      %215 = vector.load %arg16[%c0_95, %c0_96] : memref<8x32xf32, #tpu.memory_space<vmem>>, vector<8x32xf32>
      tpu.vector_store %arg16[%c0_95, %c0_96], %214 {strides = array<i32>} : memref<8x32xf32, #tpu.memory_space<vmem>>, vector<8x32xf32>,
    } else {
    }
    %c0 = arith.constant 0 : index
    %c0_1 = arith.constant 0 : index
    %3 = vector.load %arg16[%c0, %c0_1] : memref<8x32xf32, #tpu.memory_space<vmem>>, vector<8x32xf32>
    %4 = tpu.iota {dimensions = array<i32: 0>} : vector<8x8xi32>
    %5 = tpu.iota {dimensions = array<i32: 1>} : vector<8x8xi32>
    %6 = arith.cmpi sle, %5, %4 : vector<8x8xi32>
    %cst = arith.constant 0.000000e+00 : f32
    %cst_2 = arith.constant -1.000000e+09 : f32
    %7 = vector.broadcast %cst : f32 to vector<8x8xf32>
    %8 = vector.broadcast %cst_2 : f32 to vector<8x8xf32>
    %9 = arith.select %6, %7, %8 : vector<8x8xi1>, vector<8x8xf32>
    %c0_3 = arith.constant 0 : index
    %c0_4 = arith.constant 0 : index
    %c0_5 = arith.constant 0 : index
    %10 = vector.load %arg3[%c0_3, %c0_4, %c0_5] : memref<1x1x32xf32, #tpu.memory_space<vmem>>, vector<1x1x32xf32>
    %11 = vector.shape_cast %10 : vector<1x1x32xf32> to vector<1x32xf32>
    %c0_6 = arith.constant 0 : index
    %c0_7 = arith.constant 0 : index
    %c0_8 = arith.constant 0 : index
    %12 = vector.load %arg4[%c0_6, %c0_7, %c0_8] : memref<1x1x32xf32, #tpu.memory_space<vmem>>, vector<1x1x32xf32>
    %13 = vector.shape_cast %12 : vector<1x1x32xf32> to vector<1x32xf32>
    %cst_9 = arith.constant dense<0.000000e+00> : vector<8xf32>
    %14 = vector.multi_reduction <add>, %3, %cst_9 [1] : vector<8x32xf32> to vector<8xf32>
    %15 = vector.shape_cast %14 : vector<8xf32> to vector<8x1xf32>
    %cst_10 = arith.constant 3.200000e+01 : f32
    %16 = vector.broadcast %cst_10 : f32 to vector<8x1xf32>
    %17 = arith.divf %15, %16 : vector<8x1xf32>
    %18 = vector.broadcast %17 : vector<8x1xf32> to vector<8x32xf32>
    %19 = arith.subf %3, %18 : vector<8x32xf32>
    %20 = arith.mulf %19, %19 : vector<8x32xf32>
    %cst_11 = arith.constant dense<0.000000e+00> : vector<8xf32>
    %21 = vector.multi_reduction <add>, %20, %cst_11 [1] : vector<8x32xf32> to vector<8xf32>
    %22 = vector.shape_cast %21 : vector<8xf32> to vector<8x1xf32>
    %cst_12 = arith.constant 3.200000e+01 : f32
    %23 = vector.broadcast %cst_12 : f32 to vector<8x1xf32>
    %24 = arith.divf %22, %23 : vector<8x1xf32>
    %25 = vector.broadcast %17 : vector<8x1xf32> to vector<8x32xf32>
    %26 = arith.subf %3, %25 : vector<8x32xf32>
    %cst_13 = arith.constant 9.99999974E-6 : f32
    %27 = vector.broadcast %cst_13 : f32 to vector<8x1xf32>
    %28 = arith.addf %24, %27 : vector<8x1xf32>
    %29 = math.rsqrt %28 : vector<8x1xf32>
    %30 = vector.broadcast %29 : vector<8x1xf32> to vector<8x32xf32>
    %31 = arith.mulf %26, %30 : vector<8x32xf32>
    %32 = vector.broadcast %11 : vector<1x32xf32> to vector<8x32xf32>
    %33 = arith.mulf %31, %32 : vector<8x32xf32>
    %34 = vector.broadcast %13 : vector<1x32xf32> to vector<8x32xf32>
    %35 = arith.addf %33, %34 : vector<8x32xf32>
    %36 = arith.truncf %35 : vector<8x32xf32> to vector<8x32xbf16>
    %c0_14 = arith.constant 0 : index
    %c0_15 = arith.constant 0 : index
    %c0_16 = arith.constant 0 : index
    %37 = vector.load %arg5[%c0_14, %c0_15, %c0_16] : memref<1x32x96xbf16, #tpu.memory_space<vmem>>, vector<1x32x96xbf16>
    %38 = vector.shape_cast %37 : vector<1x32x96xbf16> to vector<32x96xbf16>
    %cst_17 = arith.constant dense<0.000000e+00> : vector<8x96xf32>
    %39 = tpu.matmul %36, %38, %cst_17 {dimension_numbers = #tpu.dot_dimension_numbers<[1], [0], [0], [1], [0, 0, 1, 1], [], []>} : vector<8x32xbf16>, vector<32x96xbf16>, vector<8x96xf32> -> vector<8x96xf32>
    %c0_18 = arith.constant 0 : index
    %c0_19 = arith.constant 0 : index
    %c0_20 = arith.constant 0 : index
    %40 = vector.load %arg6[%c0_18, %c0_19, %c0_20] : memref<1x1x96xf32, #tpu.memory_space<vmem>>, vector<1x1x96xf32>
    %41 = vector.shape_cast %40 : vector<1x1x96xf32> to vector<1x96xf32>
    %42 = vector.broadcast %41 : vector<1x96xf32> to vector<8x96xf32>
    %43 = arith.addf %39, %42 : vector<8x96xf32>
    %cst_21 = arith.constant 0.000000e+00 : f32
    %44 = vector.broadcast %cst_21 : f32 to vector<8x32xf32>
    %45 = vector.extract_strided_slice %43 {offsets = [0, 0], sizes = [8, 8], strides = [1, 1]} : vector<8x96xf32> to vector<8x8xf32>
    %cst_22 = arith.constant 0.353553385 : f32
    %46 = vector.broadcast %cst_22 : f32 to vector<8x8xf32>
    %47 = arith.mulf %45, %46 : vector<8x8xf32>
    %48 = arith.truncf %47 : vector<8x8xf32> to vector<8x8xbf16>
    %49 = vector.extract_strided_slice %43 {offsets = [0, 32], sizes = [8, 8], strides = [1, 1]} : vector<8x96xf32> to vector<8x8xf32>
    %50 = arith.truncf %49 : vector<8x8xf32> to vector<8x8xbf16>
    %51 = vector.extract_strided_slice %43 {offsets = [0, 64], sizes = [8, 8], strides = [1, 1]} : vector<8x96xf32> to vector<8x8xf32>
    %52 = arith.truncf %51 : vector<8x8xf32> to vector<8x8xbf16>
    %cst_23 = arith.constant dense<0.000000e+00> : vector<8x8xf32>
    %53 = tpu.matmul %48, %50, %cst_23 {dimension_numbers = #tpu.dot_dimension_numbers<[1], [1], [0], [0], [0, 0, 1, 0], [], []>} : vector<8x8xbf16>, vector<8x8xbf16>, vector<8x8xf32> -> vector<8x8xf32>
    %54 = arith.addf %53, %9 : vector<8x8xf32>
    %cst_24 = arith.constant dense<0xFF800000> : vector<8xf32>
    %55 = vector.multi_reduction <maximumf>, %54, %cst_24 [1] : vector<8x8xf32> to vector<8xf32>
    %56 = vector.shape_cast %55 : vector<8xf32> to vector<8x1xf32>
    %57 = vector.broadcast %56 : vector<8x1xf32> to vector<8x8xf32>
    %58 = arith.subf %54, %57 : vector<8x8xf32>
    %59 = math.exp %58 : vector<8x8xf32>
    %cst_25 = arith.constant dense<0.000000e+00> : vector<8xf32>
    %60 = vector.multi_reduction <add>, %59, %cst_25 [1] : vector<8x8xf32> to vector<8xf32>
    %61 = vector.shape_cast %60 : vector<8xf32> to vector<8x1xf32>
    %62 = tpu.reciprocal %61 {approx = true} : vector<8x1xf32> -> vector<8x1xf32>
    %63 = vector.broadcast %62 : vector<8x1xf32> to vector<8x8xf32>
    %64 = arith.mulf %59, %63 : vector<8x8xf32>
    %65 = arith.truncf %64 : vector<8x8xf32> to vector<8x8xbf16>
    %cst_26 = arith.constant dense<0.000000e+00> : vector<8x8xf32>
    %66 = tpu.matmul %65, %52, %cst_26 {dimension_numbers = #tpu.dot_dimension_numbers<[1], [0], [0], [1], [0, 0, 1, 1], [], []>} : vector<8x8xbf16>, vector<8x8xbf16>, vector<8x8xf32> -> vector<8x8xf32>
    %67 = arith.truncf %66 : vector<8x8xf32> to vector<8x8xbf16>
    %c0_27 = arith.constant 0 : index
    %c0_28 = arith.constant 0 : index
    %c0_29 = arith.constant 0 : index
    %c0_30 = arith.constant 0 : index
    %68 = vector.load %arg7[%c0_27, %c0_28, %c0_29, %c0_30] : memref<1x4x8x32xbf16, #tpu.memory_space<vmem>>, vector<1x1x8x32xbf16>
    %69 = vector.shape_cast %68 : vector<1x1x8x32xbf16> to vector<8x32xbf16>
    %cst_31 = arith.constant dense<0.000000e+00> : vector<8x32xf32>
    %70 = tpu.matmul %67, %69, %cst_31 {dimension_numbers = #tpu.dot_dimension_numbers<[1], [0], [0], [1], [0, 0, 1, 1], [], []>} : vector<8x8xbf16>, vector<8x32xbf16>, vector<8x32xf32> -> vector<8x32xf32>
    %71 = arith.addf %44, %70 : vector<8x32xf32>
    %72 = vector.extract_strided_slice %43 {offsets = [0, 8], sizes = [8, 8], strides = [1, 1]} : vector<8x96xf32> to vector<8x8xf32>
    %cst_32 = arith.constant 0.353553385 : f32
    %73 = vector.broadcast %cst_32 : f32 to vector<8x8xf32>
    %74 = arith.mulf %72, %73 : vector<8x8xf32>
    %75 = arith.truncf %74 : vector<8x8xf32> to vector<8x8xbf16>
    %76 = vector.extract_strided_slice %43 {offsets = [0, 40], sizes = [8, 8], strides = [1, 1]} : vector<8x96xf32> to vector<8x8xf32>
    %77 = arith.truncf %76 : vector<8x8xf32> to vector<8x8xbf16>
    %78 = vector.extract_strided_slice %43 {offsets = [0, 72], sizes = [8, 8], strides = [1, 1]} : vector<8x96xf32> to vector<8x8xf32>
    %79 = arith.truncf %78 : vector<8x8xf32> to vector<8x8xbf16>
    %cst_33 = arith.constant dense<0.000000e+00> : vector<8x8xf32>
    %80 = tpu.matmul %75, %77, %cst_33 {dimension_numbers = #tpu.dot_dimension_numbers<[1], [1], [0], [0], [0, 0, 1, 0], [], []>} : vector<8x8xbf16>, vector<8x8xbf16>, vector<8x8xf32> -> vector<8x8xf32>
    %81 = arith.addf %80, %9 : vector<8x8xf32>
    %cst_34 = arith.constant dense<0xFF800000> : vector<8xf32>
    %82 = vector.multi_reduction <maximumf>, %81, %cst_34 [1] : vector<8x8xf32> to vector<8xf32>
    %83 = vector.shape_cast %82 : vector<8xf32> to vector<8x1xf32>
    %84 = vector.broadcast %83 : vector<8x1xf32> to vector<8x8xf32>
    %85 = arith.subf %81, %84 : vector<8x8xf32>
    %86 = math.exp %85 : vector<8x8xf32>
    %cst_35 = arith.constant dense<0.000000e+00> : vector<8xf32>
    %87 = vector.multi_reduction <add>, %86, %cst_35 [1] : vector<8x8xf32> to vector<8xf32>
    %88 = vector.shape_cast %87 : vector<8xf32> to vector<8x1xf32>
    %89 = tpu.reciprocal %88 {approx = true} : vector<8x1xf32> -> vector<8x1xf32>
    %90 = vector.broadcast %89 : vector<8x1xf32> to vector<8x8xf32>
    %91 = arith.mulf %86, %90 : vector<8x8xf32>
    %92 = arith.truncf %91 : vector<8x8xf32> to vector<8x8xbf16>
    %cst_36 = arith.constant dense<0.000000e+00> : vector<8x8xf32>
    %93 = tpu.matmul %92, %79, %cst_36 {dimension_numbers = #tpu.dot_dimension_numbers<[1], [0], [0], [1], [0, 0, 1, 1], [], []>} : vector<8x8xbf16>, vector<8x8xbf16>, vector<8x8xf32> -> vector<8x8xf32>
    %94 = arith.truncf %93 : vector<8x8xf32> to vector<8x8xbf16>
    %c0_37 = arith.constant 0 : index
    %c1 = arith.constant 1 : index
    %c0_38 = arith.constant 0 : index
    %c0_39 = arith.constant 0 : index
    %95 = vector.load %arg7[%c0_37, %c1, %c0_38, %c0_39] : memref<1x4x8x32xbf16, #tpu.memory_space<vmem>>, vector<1x1x8x32xbf16>
    %96 = vector.shape_cast %95 : vector<1x1x8x32xbf16> to vector<8x32xbf16>
    %cst_40 = arith.constant dense<0.000000e+00> : vector<8x32xf32>
    %97 = tpu.matmul %94, %96, %cst_40 {dimension_numbers = #tpu.dot_dimension_numbers<[1], [0], [0], [1], [0, 0, 1, 1], [], []>} : vector<8x8xbf16>, vector<8x32xbf16>, vector<8x32xf32> -> vector<8x32xf32>
    %98 = arith.addf %71, %97 : vector<8x32xf32>
    %99 = vector.extract_strided_slice %43 {offsets = [0, 16], sizes = [8, 8], strides = [1, 1]} : vector<8x96xf32> to vector<8x8xf32>
    %cst_41 = arith.constant 0.353553385 : f32
    %100 = vector.broadcast %cst_41 : f32 to vector<8x8xf32>
    %101 = arith.mulf %99, %100 : vector<8x8xf32>
    %102 = arith.truncf %101 : vector<8x8xf32> to vector<8x8xbf16>
    %103 = vector.extract_strided_slice %43 {offsets = [0, 48], sizes = [8, 8], strides = [1, 1]} : vector<8x96xf32> to vector<8x8xf32>
    %104 = arith.truncf %103 : vector<8x8xf32> to vector<8x8xbf16>
    %105 = vector.extract_strided_slice %43 {offsets = [0, 80], sizes = [8, 8], strides = [1, 1]} : vector<8x96xf32> to vector<8x8xf32>
    %106 = arith.truncf %105 : vector<8x8xf32> to vector<8x8xbf16>
    %cst_42 = arith.constant dense<0.000000e+00> : vector<8x8xf32>
    %107 = tpu.matmul %102, %104, %cst_42 {dimension_numbers = #tpu.dot_dimension_numbers<[1], [1], [0], [0], [0, 0, 1, 0], [], []>} : vector<8x8xbf16>, vector<8x8xbf16>, vector<8x8xf32> -> vector<8x8xf32>
    %108 = arith.addf %107, %9 : vector<8x8xf32>
    %cst_43 = arith.constant dense<0xFF800000> : vector<8xf32>
    %109 = vector.multi_reduction <maximumf>, %108, %cst_43 [1] : vector<8x8xf32> to vector<8xf32>
    %110 = vector.shape_cast %109 : vector<8xf32> to vector<8x1xf32>
    %111 = vector.broadcast %110 : vector<8x1xf32> to vector<8x8xf32>
    %112 = arith.subf %108, %111 : vector<8x8xf32>
    %113 = math.exp %112 : vector<8x8xf32>
    %cst_44 = arith.constant dense<0.000000e+00> : vector<8xf32>
    %114 = vector.multi_reduction <add>, %113, %cst_44 [1] : vector<8x8xf32> to vector<8xf32>
    %115 = vector.shape_cast %114 : vector<8xf32> to vector<8x1xf32>
    %116 = tpu.reciprocal %115 {approx = true} : vector<8x1xf32> -> vector<8x1xf32>
    %117 = vector.broadcast %116 : vector<8x1xf32> to vector<8x8xf32>
    %118 = arith.mulf %113, %117 : vector<8x8xf32>
    %119 = arith.truncf %118 : vector<8x8xf32> to vector<8x8xbf16>
    %cst_45 = arith.constant dense<0.000000e+00> : vector<8x8xf32>
    %120 = tpu.matmul %119, %106, %cst_45 {dimension_numbers = #tpu.dot_dimension_numbers<[1], [0], [0], [1], [0, 0, 1, 1], [], []>} : vector<8x8xbf16>, vector<8x8xbf16>, vector<8x8xf32> -> vector<8x8xf32>
    %121 = arith.truncf %120 : vector<8x8xf32> to vector<8x8xbf16>
    %c0_46 = arith.constant 0 : index
    %c2 = arith.constant 2 : index
    %c0_47 = arith.constant 0 : index
    %c0_48 = arith.constant 0 : index
    %122 = vector.load %arg7[%c0_46, %c2, %c0_47, %c0_48] : memref<1x4x8x32xbf16, #tpu.memory_space<vmem>>, vector<1x1x8x32xbf16>
    %123 = vector.shape_cast %122 : vector<1x1x8x32xbf16> to vector<8x32xbf16>
    %cst_49 = arith.constant dense<0.000000e+00> : vector<8x32xf32>
    %124 = tpu.matmul %121, %123, %cst_49 {dimension_numbers = #tpu.dot_dimension_numbers<[1], [0], [0], [1], [0, 0, 1, 1], [], []>} : vector<8x8xbf16>, vector<8x32xbf16>, vector<8x32xf32> -> vector<8x32xf32>
    %125 = arith.addf %98, %124 : vector<8x32xf32>
    %126 = vector.extract_strided_slice %43 {offsets = [0, 24], sizes = [8, 8], strides = [1, 1]} : vector<8x96xf32> to vector<8x8xf32>
    %cst_50 = arith.constant 0.353553385 : f32
    %127 = vector.broadcast %cst_50 : f32 to vector<8x8xf32>
    %128 = arith.mulf %126, %127 : vector<8x8xf32>
    %129 = arith.truncf %128 : vector<8x8xf32> to vector<8x8xbf16>
    %130 = vector.extract_strided_slice %43 {offsets = [0, 56], sizes = [8, 8], strides = [1, 1]} : vector<8x96xf32> to vector<8x8xf32>
    %131 = arith.truncf %130 : vector<8x8xf32> to vector<8x8xbf16>
    %132 = vector.extract_strided_slice %43 {offsets = [0, 88], sizes = [8, 8], strides = [1, 1]} : vector<8x96xf32> to vector<8x8xf32>
    %133 = arith.truncf %132 : vector<8x8xf32> to vector<8x8xbf16>
    %cst_51 = arith.constant dense<0.000000e+00> : vector<8x8xf32>
    %134 = tpu.matmul %129, %131, %cst_51 {dimension_numbers = #tpu.dot_dimension_numbers<[1], [1], [0], [0], [0, 0, 1, 0], [], []>} : vector<8x8xbf16>, vector<8x8xbf16>, vector<8x8xf32> -> vector<8x8xf32>
    %135 = arith.addf %134, %9 : vector<8x8xf32>
    %cst_52 = arith.constant dense<0xFF800000> : vector<8xf32>
    %136 = vector.multi_reduction <maximumf>, %135, %cst_52 [1] : vector<8x8xf32> to vector<8xf32>
    %137 = vector.shape_cast %136 : vector<8xf32> to vector<8x1xf32>
    %138 = vector.broadcast %137 : vector<8x1xf32> to vector<8x8xf32>
    %139 = arith.subf %135, %138 : vector<8x8xf32>
    %140 = math.exp %139 : vector<8x8xf32>
    %cst_53 = arith.constant dense<0.000000e+00> : vector<8xf32>
    %141 = vector.multi_reduction <add>, %140, %cst_53 [1] : vector<8x8xf32> to vector<8xf32>
    %142 = vector.shape_cast %141 : vector<8xf32> to vector<8x1xf32>
    %143 = tpu.reciprocal %142 {approx = true} : vector<8x1xf32> -> vector<8x1xf32>
    %144 = vector.broadcast %143 : vector<8x1xf32> to vector<8x8xf32>
    %145 = arith.mulf %140, %144 : vector<8x8xf32>
    %146 = arith.truncf %145 : vector<8x8xf32> to vector<8x8xbf16>
    %cst_54 = arith.constant dense<0.000000e+00> : vector<8x8xf32>
    %147 = tpu.matmul %146, %133, %cst_54 {dimension_numbers = #tpu.dot_dimension_numbers<[1], [0], [0], [1], [0, 0, 1, 1], [], []>} : vector<8x8xbf16>, vector<8x8xbf16>, vector<8x8xf32> -> vector<8x8xf32>
    %148 = arith.truncf %147 : vector<8x8xf32> to vector<8x8xbf16>
    %c0_55 = arith.constant 0 : index
    %c3 = arith.constant 3 : index
    %c0_56 = arith.constant 0 : index
    %c0_57 = arith.constant 0 : index
    %149 = vector.load %arg7[%c0_55, %c3, %c0_56, %c0_57] : memref<1x4x8x32xbf16, #tpu.memory_space<vmem>>, vector<1x1x8x32xbf16>
    %150 = vector.shape_cast %149 : vector<1x1x8x32xbf16> to vector<8x32xbf16>
    %cst_58 = arith.constant dense<0.000000e+00> : vector<8x32xf32>
    %151 = tpu.matmul %148, %150, %cst_58 {dimension_numbers = #tpu.dot_dimension_numbers<[1], [0], [0], [1], [0, 0, 1, 1], [], []>} : vector<8x8xbf16>, vector<8x32xbf16>, vector<8x32xf32> -> vector<8x32xf32>
    %152 = arith.addf %125, %151 : vector<8x32xf32>
    %153 = arith.addf %3, %152 : vector<8x32xf32>
    %c0_59 = arith.constant 0 : index
    %c0_60 = arith.constant 0 : index
    %c0_61 = arith.constant 0 : index
    %154 = vector.load %arg8[%c0_59, %c0_60, %c0_61] : memref<1x1x32xf32, #tpu.memory_space<vmem>>, vector<1x1x32xf32>
    %155 = vector.shape_cast %154 : vector<1x1x32xf32> to vector<1x32xf32>
    %156 = vector.broadcast %155 : vector<1x32xf32> to vector<8x32xf32>
    %157 = arith.addf %153, %156 : vector<8x32xf32>
    %c0_62 = arith.constant 0 : index
    %c0_63 = arith.constant 0 : index
    %c0_64 = arith.constant 0 : index
    %158 = vector.load %arg9[%c0_62, %c0_63, %c0_64] : memref<1x1x32xf32, #tpu.memory_space<vmem>>, vector<1x1x32xf32>
    %159 = vector.shape_cast %158 : vector<1x1x32xf32> to vector<1x32xf32>
    %c0_65 = arith.constant 0 : index
    %c0_66 = arith.constant 0 : index
    %c0_67 = arith.constant 0 : index
    %160 = vector.load %arg10[%c0_65, %c0_66, %c0_67] : memref<1x1x32xf32, #tpu.memory_space<vmem>>, vector<1x1x32xf32>
    %161 = vector.shape_cast %160 : vector<1x1x32xf32> to vector<1x32xf32>
    %cst_68 = arith.constant dense<0.000000e+00> : vector<8xf32>
    %162 = vector.multi_reduction <add>, %157, %cst_68 [1] : vector<8x32xf32> to vector<8xf32>
    %163 = vector.shape_cast %162 : vector<8xf32> to vector<8x1xf32>
    %cst_69 = arith.constant 3.200000e+01 : f32
    %164 = vector.broadcast %cst_69 : f32 to vector<8x1xf32>
    %165 = arith.divf %163, %164 : vector<8x1xf32>
    %166 = vector.broadcast %165 : vector<8x1xf32> to vector<8x32xf32>
    %167 = arith.subf %157, %166 : vector<8x32xf32>
    %168 = arith.mulf %167, %167 : vector<8x32xf32>
    %cst_70 = arith.constant dense<0.000000e+00> : vector<8xf32>
    %169 = vector.multi_reduction <add>, %168, %cst_70 [1] : vector<8x32xf32> to vector<8xf32>
    %170 = vector.shape_cast %169 : vector<8xf32> to vector<8x1xf32>
    %cst_71 = arith.constant 3.200000e+01 : f32
    %171 = vector.broadcast %cst_71 : f32 to vector<8x1xf32>
    %172 = arith.divf %170, %171 : vector<8x1xf32>
    %173 = vector.broadcast %165 : vector<8x1xf32> to vector<8x32xf32>
    %174 = arith.subf %157, %173 : vector<8x32xf32>
    %cst_72 = arith.constant 9.99999974E-6 : f32
    %175 = vector.broadcast %cst_72 : f32 to vector<8x1xf32>
    %176 = arith.addf %172, %175 : vector<8x1xf32>
    %177 = math.rsqrt %176 : vector<8x1xf32>
    %178 = vector.broadcast %177 : vector<8x1xf32> to vector<8x32xf32>
    %179 = arith.mulf %174, %178 : vector<8x32xf32>
    %180 = vector.broadcast %159 : vector<1x32xf32> to vector<8x32xf32>
    %181 = arith.mulf %179, %180 : vector<8x32xf32>
    %182 = vector.broadcast %161 : vector<1x32xf32> to vector<8x32xf32>
    %183 = arith.addf %181, %182 : vector<8x32xf32>
    %184 = arith.truncf %183 : vector<8x32xf32> to vector<8x32xbf16>
    %c0_73 = arith.constant 0 : index
    %c0_74 = arith.constant 0 : index
    %c0_75 = arith.constant 0 : index
    %185 = vector.load %arg11[%c0_73, %c0_74, %c0_75] : memref<1x32x128xbf16, #tpu.memory_space<vmem>>, vector<1x32x128xbf16>
    %186 = vector.shape_cast %185 : vector<1x32x128xbf16> to vector<32x128xbf16>
    %cst_76 = arith.constant dense<0.000000e+00> : vector<8x128xf32>
    %187 = tpu.matmul %184, %186, %cst_76 {dimension_numbers = #tpu.dot_dimension_numbers<[1], [0], [0], [1], [0, 0, 1, 1], [], []>} : vector<8x32xbf16>, vector<32x128xbf16>, vector<8x128xf32> -> vector<8x128xf32>
    %c0_77 = arith.constant 0 : index
    %c0_78 = arith.constant 0 : index
    %c0_79 = arith.constant 0 : index
    %188 = vector.load %arg12[%c0_77, %c0_78, %c0_79] : memref<1x1x128xf32, #tpu.memory_space<vmem>>, vector<1x1x128xf32>
    %189 = vector.shape_cast %188 : vector<1x1x128xf32> to vector<1x128xf32>
    %190 = vector.broadcast %189 : vector<1x128xf32> to vector<8x128xf32>
    %191 = arith.addf %187, %190 : vector<8x128xf32>
    %cst_80 = arith.constant 1.702000e+00 : f32
    %192 = vector.broadcast %cst_80 : f32 to vector<8x128xf32>
    %193 = arith.mulf %192, %191 : vector<8x128xf32>
    %194 = arith.negf %193 : vector<8x128xf32>
    %195 = math.exp %194 : vector<8x128xf32>
    %cst_81 = arith.constant 1.000000e+00 : f32
    %196 = vector.broadcast %cst_81 : f32 to vector<8x128xf32>
    %197 = arith.addf %196, %195 : vector<8x128xf32>
    %198 = arith.divf %196, %197 : vector<8x128xf32>
    %199 = arith.mulf %191, %198 : vector<8x128xf32>
    %200 = arith.truncf %199 : vector<8x128xf32> to vector<8x128xbf16>
    %c0_82 = arith.constant 0 : index
    %c0_83 = arith.constant 0 : index
    %c0_84 = arith.constant 0 : index
    %201 = vector.load %arg13[%c0_82, %c0_83, %c0_84] : memref<1x128x32xbf16, #tpu.memory_space<vmem>>, vector<1x128x32xbf16>
    %202 = vector.shape_cast %201 : vector<1x128x32xbf16> to vector<128x32xbf16>
    %cst_85 = arith.constant dense<0.000000e+00> : vector<8x32xf32>
    %203 = tpu.matmul %200, %202, %cst_85 {dimension_numbers = #tpu.dot_dimension_numbers<[1], [0], [0], [1], [0, 0, 1, 1], [], []>} : vector<8x128xbf16>, vector<128x32xbf16>, vector<8x32xf32> -> vector<8x32xf32>
    %c0_86 = arith.constant 0 : index
    %c0_87 = arith.constant 0 : index
    %c0_88 = arith.constant 0 : index
    %204 = vector.load %arg14[%c0_86, %c0_87, %c0_88] : memref<1x1x32xf32, #tpu.memory_space<vmem>>, vector<1x1x32xf32>
    %205 = vector.shape_cast %204 : vector<1x1x32xf32> to vector<1x32xf32>
    %206 = vector.broadcast %205 : vector<1x32xf32> to vector<8x32xf32>
    %207 = arith.addf %203, %206 : vector<8x32xf32>
    %208 = arith.addf %157, %207 : vector<8x32xf32>
    %c0_89 = arith.constant 0 : index
    %c0_90 = arith.constant 0 : index
    %209 = vector.load %arg16[%c0_89, %c0_90] : memref<8x32xf32, #tpu.memory_space<vmem>>, vector<8x32xf32>
    tpu.vector_store %arg16[%c0_89, %c0_90], %208 {strides = array<i32>} : memref<8x32xf32, #tpu.memory_space<vmem>>, vector<8x32xf32>,
    %c1_i32 = arith.constant 1 : i32
    %210 = arith.cmpi eq, %arg1, %c1_i32 : i32
    %211 = arith.extui %210 : i1 to i32
    %c0_i32_91 = arith.constant 0 : i32
    %212 = arith.cmpi ne, %211, %c0_i32_91 : i32
    scf.if %212 {
      %c0_92 = arith.constant 0 : index
      %c0_93 = arith.constant 0 : index
      %c0_94 = arith.constant 0 : index
      %213 = vector.load %arg15[%c0_92, %c0_93, %c0_94] : memref<1x8x32xf32, #tpu.memory_space<vmem>>, vector<1x8x32xf32>
      %214 = vector.shape_cast %213 : vector<1x8x32xf32> to vector<8x32xf32>
      %215 = vector.shape_cast %208 : vector<8x32xf32> to vector<1x8x32xf32>
      tpu.vector_store %arg15[%c0_92, %c0_93, %c0_94], %215 {strides = array<i32>} : memref<1x8x32xf32, #tpu.memory_space<vmem>>, vector<1x8x32xf32>,
    } else {
    }
    return
  }
  func.func @transform_0(%arg0: i32, %arg1: i32) -> (i32, i32, i32) {
    %c0_i32 = arith.constant 0 : i32
    %c0_i32_0 = arith.constant 0 : i32
    %c0_i32_1 = arith.constant 0 : i32
    return %arg0, %c0_i32, %c0_i32_0 : i32, i32, i32
  }
  func.func @transform_1(%arg0: i32, %arg1: i32) -> (i32, i32, i32) {
    %c0_i32 = arith.constant 0 : i32
    %c0_i32_0 = arith.constant 0 : i32
    %c0_i32_1 = arith.constant 0 : i32
    return %arg1, %c0_i32, %c0_i32_0 : i32, i32, i32
  }
  func.func @transform_2(%arg0: i32, %arg1: i32) -> (i32, i32, i32) {
    %c0_i32 = arith.constant 0 : i32
    %c0_i32_0 = arith.constant 0 : i32
    %c0_i32_1 = arith.constant 0 : i32
    return %arg1, %c0_i32, %c0_i32_0 : i32, i32, i32
  }
  func.func @transform_3(%arg0: i32, %arg1: i32) -> (i32, i32, i32) {
    %c0_i32 = arith.constant 0 : i32
    %c0_i32_0 = arith.constant 0 : i32
    %c0_i32_1 = arith.constant 0 : i32
    return %arg1, %c0_i32, %c0_i32_0 : i32, i32, i32
  }
  func.func @transform_4(%arg0: i32, %arg1: i32) -> (i32, i32, i32) {
    %c0_i32 = arith.constant 0 : i32
    %c0_i32_0 = arith.constant 0 : i32
    %c0_i32_1 = arith.constant 0 : i32
    return %arg1, %c0_i32, %c0_i32_0 : i32, i32, i32
  }
  func.func @transform_5(%arg0: i32, %arg1: i32) -> (i32, i32, i32, i32) {
    %c0_i32 = arith.constant 0 : i32
    %c0_i32_0 = arith.constant 0 : i32
    %c0_i32_1 = arith.constant 0 : i32
    %c0_i32_2 = arith.constant 0 : i32
    return %arg1, %c0_i32, %c0_i32_0, %c0_i32_1 : i32, i32, i32, i32
  }
  func.func @transform_6(%arg0: i32, %arg1: i32) -> (i32, i32, i32) {
    %c0_i32 = arith.constant 0 : i32
    %c0_i32_0 = arith.constant 0 : i32
    %c0_i32_1 = arith.constant 0 : i32
    return %arg1, %c0_i32, %c0_i32_0 : i32, i32, i32
  }
  func.func @transform_7(%arg0: i32, %arg1: i32) -> (i32, i32, i32) {
    %c0_i32 = arith.constant 0 : i32
    %c0_i32_0 = arith.constant 0 : i32
    %c0_i32_1 = arith.constant 0 : i32
    return %arg1, %c0_i32, %c0_i32_0 : i32, i32, i32
  }
  func.func @transform_8(%arg0: i32, %arg1: i32) -> (i32, i32, i32) {
    %c0_i32 = arith.constant 0 : i32
    %c0_i32_0 = arith.constant 0 : i32
    %c0_i32_1 = arith.constant 0 : i32
    return %arg1, %c0_i32, %c0_i32_0 : i32, i32, i32
  }
  func.func @transform_9(%arg0: i32, %arg1: i32) -> (i32, i32, i32) {
    %c0_i32 = arith.constant 0 : i32
    %c0_i32_0 = arith.constant 0 : i32
    %c0_i32_1 = arith.constant 0 : i32
    return %arg1, %c0_i32, %c0_i32_0 : i32, i32, i32
  }
  func.func @transform_10(%arg0: i32, %arg1: i32) -> (i32, i32, i32) {
    %c0_i32 = arith.constant 0 : i32
    %c0_i32_0 = arith.constant 0 : i32
    %c0_i32_1 = arith.constant 0 : i32
    return %arg1, %c0_i32, %c0_i32_0 : i32, i32, i32
  }
  func.func @transform_11(%arg0: i32, %arg1: i32) -> (i32, i32, i32) {
    %c0_i32 = arith.constant 0 : i32
    %c0_i32_0 = arith.constant 0 : i32
    %c0_i32_1 = arith.constant 0 : i32
    return %arg1, %c0_i32, %c0_i32_0 : i32, i32, i32
  }
  func.func @transform_12(%arg0: i32, %arg1: i32) -> (i32, i32, i32) {
    %c0_i32 = arith.constant 0 : i32
    %c0_i32_0 = arith.constant 0 : i32
    %c0_i32_1 = arith.constant 0 : i32
    return %arg1, %c0_i32, %c0_i32_0 : i32, i32, i32
  }
  func.func @transform_13(%arg0: i32, %arg1: i32) -> (i32, i32, i32) {
    %c0_i32 = arith.constant 0 : i32
    %c0_i32_0 = arith.constant 0 : i32
    %c0_i32_1 = arith.constant 0 : i32
    return %arg0, %c0_i32, %c0_i32_0 : i32, i32, i32
  }
}

</mosaic_0001>

<llo_original>
// kernel: tpu_custom_call.1
$region0: #{tpu_custom_call.1}
  #allocation0 [shape = 'u32[]', space=smem, size = 0x4, offset = 0x4, fixed_abs, tag = 'smem constant byte address 0x4 - core index']
  #allocation1 [shape = 'u32[72,128]{1,0:T(1,128)}', space=vmem, size = 0x9000, scoped, tag = 'internal scratch']
  #allocation2 [shape = 'f32[8,32]{1,0:T(8,128)}', space=vmem, size = 0x1000, scoped, tag = 'scratch operand']
  %s0 = inlined_call_operand.vmem [shape: f32[2,8,32], index: 0, kind: input, shape index: {}]
  %s1 = inlined_call_operand.vmem [shape: f32[2,1,32], index: 1, kind: input, shape index: {}]
  %s2 = inlined_call_operand.vmem [shape: f32[2,1,32], index: 2, kind: input, shape index: {}]
  %s3 = inlined_call_operand.vmem [shape: bf16[2,32,96], index: 3, kind: input, shape index: {}]
  %s4 = inlined_call_operand.vmem [shape: f32[2,1,96], index: 4, kind: input, shape index: {}]
  %s5 = inlined_call_operand.vmem [shape: bf16[2,4,8,32], index: 5, kind: input, shape index: {}]
  %s6 = inlined_call_operand.vmem [shape: f32[2,1,32], index: 6, kind: input, shape index: {}]
  %s7 = inlined_call_operand.vmem [shape: f32[2,1,32], index: 7, kind: input, shape index: {}]
  %s8 = inlined_call_operand.vmem [shape: f32[2,1,32], index: 8, kind: input, shape index: {}]
  %s9 = inlined_call_operand.vmem [shape: bf16[2,32,128], index: 9, kind: input, shape index: {}]
  %s10 = inlined_call_operand.vmem [shape: f32[2,1,128], index: 10, kind: input, shape index: {}]
  %s11 = inlined_call_operand.vmem [shape: bf16[2,128,32], index: 11, kind: input, shape index: {}]
  %s12 = inlined_call_operand.vmem [shape: f32[2,1,32], index: 12, kind: input, shape index: {}]
  %s13 = inlined_call_operand.hbm [shape: f32[2,8,32], index: 13, kind: output, shape index: {}]
  %s14 = sld [smem:[#allocation0]]
  $region93: #{tpu_custom_call.1} parent=0
    _
  %s16 = ssub.s32 1, %s14
  %s17 = scalar_select 0, %s16, %s14
  $region1: #{tpu_custom_call.1} parent=0
    #allocation3 [shape = 'u8[8192]{0}', space=vmem, size = 0x2000, scoped, tag = 'output window, operand 0']
    #allocation4 [shape = 's32[2]{0}', space=sflag, size = 0x8, scoped, tag = 'scoped memory for tpu_custom_call.1']
    %18 = vsyncpa [#allocation4], 0
    %s19 = scalar_lea.sflag [#allocation4], 1
    %20 = vsyncpa %s19, 0
    loop: start=0, step=1, limit=6
    $region2: #{tpu_custom_call.1} parent=1 // loop_pre_header
      _
    $region3: #{tpu_custom_call.1} parent=1 // loop_header
      %s22 = sphi 0, %s26
      %p23 = scmp.ge.s32.totalorder %s22, 6
      %s29 = sphi 0, %s41
      %s30 = sphi 0, %s37
      %s31 = sphi 0, %s29
      %s32 = sphi 0, %s30
      %s33 = sphi 0, %s31
      %s34 = sphi 0, %s32
      %s44 = sphi 0, %s46
      %s47 = sphi 0, %s44
      %s48 = sphi 0, %s47
      %s64 = sphi 0, %s48
      %s70 = sphi 0, %s72
      %s73 = sphi 0, %s70
      %s74 = sphi 0, %s73
      %s90 = sphi 0, %s74
      %s96 = sphi 0, %s98
      %s99 = sphi 0, %s96
      %s100 = sphi 0, %s99
      %s116 = sphi 0, %s100
      %s122 = sphi 0, %s124
      %s125 = sphi 0, %s122
      %s126 = sphi 0, %s125
      %s142 = sphi 0, %s126
      %s148 = sphi 0, %s150
      %s151 = sphi 0, %s148
      %s152 = sphi 0, %s151
      %s168 = sphi 0, %s152
      %s174 = sphi 0, %s176
      %s177 = sphi 0, %s174
      %s178 = sphi 0, %s177
      %s194 = sphi 0, %s178
      %s200 = sphi 0, %s202
      %s203 = sphi 0, %s200
      %s204 = sphi 0, %s203
      %s220 = sphi 0, %s204
      %s226 = sphi 0, %s228
      %s229 = sphi 0, %s226
      %s230 = sphi 0, %s229
      %s246 = sphi 0, %s230
      %s252 = sphi 0, %s254
      %s255 = sphi 0, %s252
      %s256 = sphi 0, %s255
      %s272 = sphi 0, %s256
      %s278 = sphi 0, %s280
      %s281 = sphi 0, %s278
      %s282 = sphi 0, %s281
      %s298 = sphi 0, %s282
      %s304 = sphi 0, %s306
      %s307 = sphi 0, %s304
      %s308 = sphi 0, %s307
      %s324 = sphi 0, %s308
      %s330 = sphi 0, %s332
      %s333 = sphi 0, %s330
      %s334 = sphi 0, %s333
      %s350 = sphi 0, %s334
      %s356 = sphi 0, %s358
      %s359 = sphi 0, %s356
      %s360 = sphi 0, %s359
      %s376 = sphi 0, %s360
      %s382 = sphi 0, %s384
      %s385 = sphi 0, %s382
      %s386 = sphi 0, %s385
      %s402 = sphi 0, %s386
    $region4: #{tpu_custom_call.1} parent=1 // loop_header_branch
      %25 = sbr.rel (%p23) target = $region8
    $region5: #{tpu_custom_call.1} parent=1 // loop_body
      %s27 = ssub.s32 %s22, 1
      %s28 = ssub.s32 %s22, 2
      %s35 = sadd.s32 1, %s30
      %p36 = scmp.ge.s32.totalorder %s35, 2
      %s37 = scalar_select %p36, 0, %s35
      %s38 = sadd.s32 1, %s29
      %s39 = scalar_select %p36, %s38, %s29
      %p40 = scmp.ge.s32.totalorder %s39, 2
      %s41 = scalar_select %p40, 0, %s39
      %s42 = ssub.s32 %s29, %s41
      %p43 = scmp.eq.s32.totalorder %s42, 0
      %s45 = sadd.s32 %s44, 1
      %s46 = scalar_select %p43, %s44, %s45
      %p49 = pneg %p43
      %p50 = scmp.eq.s32.totalorder %s22, 3
      %p51 = por %p49, %p50
      %p52 = scmp.ne.s32.totalorder %s44, %s47
      %p53 = scmp.eq.s32.totalorder %s22, 0
      %p54 = por %p52, %p53
      %p55 = scmp.ne.s32.totalorder %s44, %s47
      %p56 = scmp.eq.s32.totalorder %s27, 3
      %p57 = por %p55, %p56
      %p58 = scmp.ne.s32.totalorder %s47, %s48
      %p59 = scmp.eq.s32.totalorder %s27, 0
      %p60 = por %p58, %p59
      %p61 = scmp.ne.s32.totalorder %s47, %s48
      %p62 = scmp.eq.s32.totalorder %s28, 3
      %p63 = por %p61, %p62
      %p65 = scmp.ne.s32.totalorder %s48, %s64
      %p66 = scmp.eq.s32.totalorder %s28, 0
      %p67 = por %p65, %p66
      %s68 = ssub.s32 %s30, %s37
      %p69 = scmp.eq.s32.totalorder %s68, 0
      %s71 = sadd.s32 %s70, 1
      %s72 = scalar_select %p69, %s70, %s71
      %p75 = pneg %p69
      %p76 = scmp.eq.s32.totalorder %s22, 3
      %p77 = por %p75, %p76
      %p78 = scmp.ne.s32.totalorder %s70, %s73
      %p79 = scmp.eq.s32.totalorder %s22, 0
      %p80 = por %p78, %p79
      %p81 = scmp.ne.s32.totalorder %s70, %s73
      %p82 = scmp.eq.s32.totalorder %s27, 3
      %p83 = por %p81, %p82
      %p84 = scmp.ne.s32.totalorder %s73, %s74
      %p85 = scmp.eq.s32.totalorder %s27, 0
      %p86 = por %p84, %p85
      %p87 = scmp.ne.s32.totalorder %s73, %s74
      %p88 = scmp.eq.s32.totalorder %s28, 3
      %p89 = por %p87, %p88
      %p91 = scmp.ne.s32.totalorder %s74, %s90
      %p92 = scmp.eq.s32.totalorder %s28, 0
      %p93 = por %p91, %p92
      %s94 = ssub.s32 %s30, %s37
      %p95 = scmp.eq.s32.totalorder %s94, 0
      %s97 = sadd.s32 %s96, 1
      %s98 = scalar_select %p95, %s96, %s97
      %p101 = pneg %p95
      %p102 = scmp.eq.s32.totalorder %s22, 3
      %p103 = por %p101, %p102
      %p104 = scmp.ne.s32.totalorder %s96, %s99
      %p105 = scmp.eq.s32.totalorder %s22, 0
      %p106 = por %p104, %p105
      %p107 = scmp.ne.s32.totalorder %s96, %s99
      %p108 = scmp.eq.s32.totalorder %s27, 3
      %p109 = por %p107, %p108
      %p110 = scmp.ne.s32.totalorder %s99, %s100
      %p111 = scmp.eq.s32.totalorder %s27, 0
      %p112 = por %p110, %p111
      %p113 = scmp.ne.s32.totalorder %s99, %s100
      %p114 = scmp.eq.s32.totalorder %s28, 3
      %p115 = por %p113, %p114
      %p117 = scmp.ne.s32.totalorder %s100, %s116
      %p118 = scmp.eq.s32.totalorder %s28, 0
      %p119 = por %p117, %p118
      %s120 = ssub.s32 %s30, %s37
      %p121 = scmp.eq.s32.totalorder %s120, 0
      %s123 = sadd.s32 %s122, 1
      %s124 = scalar_select %p121, %s122, %s123
      %p127 = pneg %p121
      %p128 = scmp.eq.s32.totalorder %s22, 3
      %p129 = por %p127, %p128
      %p130 = scmp.ne.s32.totalorder %s122, %s125
      %p131 = scmp.eq.s32.totalorder %s22, 0
      %p132 = por %p130, %p131
      %p133 = scmp.ne.s32.totalorder %s122, %s125
      %p134 = scmp.eq.s32.totalorder %s27, 3
      %p135 = por %p133, %p134
      %p136 = scmp.ne.s32.totalorder %s125, %s126
      %p137 = scmp.eq.s32.totalorder %s27, 0
      %p138 = por %p136, %p137
      %p139 = scmp.ne.s32.totalorder %s125, %s126
      %p140 = scmp.eq.s32.totalorder %s28, 3
      %p141 = por %p139, %p140
      %p143 = scmp.ne.s32.totalorder %s126, %s142
      %p144 = scmp.eq.s32.totalorder %s28, 0
      %p145 = por %p143, %p144
      %s146 = ssub.s32 %s30, %s37
      %p147 = scmp.eq.s32.totalorder %s146, 0
      %s149 = sadd.s32 %s148, 1
      %s150 = scalar_select %p147, %s148, %s149
      %p153 = pneg %p147
      %p154 = scmp.eq.s32.totalorder %s22, 3
      %p155 = por %p153, %p154
      %p156 = scmp.ne.s32.totalorder %s148, %s151
      %p157 = scmp.eq.s32.totalorder %s22, 0
      %p158 = por %p156, %p157
      %p159 = scmp.ne.s32.totalorder %s148, %s151
      %p160 = scmp.eq.s32.totalorder %s27, 3
      %p161 = por %p159, %p160
      %p162 = scmp.ne.s32.totalorder %s151, %s152
      %p163 = scmp.eq.s32.totalorder %s27, 0
      %p164 = por %p162, %p163
      %p165 = scmp.ne.s32.totalorder %s151, %s152
      %p166 = scmp.eq.s32.totalorder %s28, 3
      %p167 = por %p165, %p166
      %p169 = scmp.ne.s32.totalorder %s152, %s168
      %p170 = scmp.eq.s32.totalorder %s28, 0
      %p171 = por %p169, %p170
      %s172 = ssub.s32 %s30, %s37
      %p173 = scmp.eq.s32.totalorder %s172, 0
      %s175 = sadd.s32 %s174, 1
      %s176 = scalar_select %p173, %s174, %s175
      %p179 = pneg %p173
      %p180 = scmp.eq.s32.totalorder %s22, 3
      %p181 = por %p179, %p180
      %p182 = scmp.ne.s32.totalorder %s174, %s177
      %p183 = scmp.eq.s32.totalorder %s22, 0
      %p184 = por %p182, %p183
      %p185 = scmp.ne.s32.totalorder %s174, %s177
      %p186 = scmp.eq.s32.totalorder %s27, 3
      %p187 = por %p185, %p186
      %p188 = scmp.ne.s32.totalorder %s177, %s178
      %p189 = scmp.eq.s32.totalorder %s27, 0
      %p190 = por %p188, %p189
      %p191 = scmp.ne.s32.totalorder %s177, %s178
      %p192 = scmp.eq.s32.totalorder %s28, 3
      %p193 = por %p191, %p192
      %p195 = scmp.ne.s32.totalorder %s178, %s194
      %p196 = scmp.eq.s32.totalorder %s28, 0
      %p197 = por %p195, %p196
      %s198 = ssub.s32 %s30, %s37
      %p199 = scmp.eq.s32.totalorder %s198, 0
      %s201 = sadd.s32 %s200, 1
      %s202 = scalar_select %p199, %s200, %s201
      %p205 = pneg %p199
      %p206 = scmp.eq.s32.totalorder %s22, 3
      %p207 = por %p205, %p206
      %p208 = scmp.ne.s32.totalorder %s200, %s203
      %p209 = scmp.eq.s32.totalorder %s22, 0
      %p210 = por %p208, %p209
      %p211 = scmp.ne.s32.totalorder %s200, %s203
      %p212 = scmp.eq.s32.totalorder %s27, 3
      %p213 = por %p211, %p212
      %p214 = scmp.ne.s32.totalorder %s203, %s204
      %p215 = scmp.eq.s32.totalorder %s27, 0
      %p216 = por %p214, %p215
      %p217 = scmp.ne.s32.totalorder %s203, %s204
      %p218 = scmp.eq.s32.totalorder %s28, 3
      %p219 = por %p217, %p218
      %p221 = scmp.ne.s32.totalorder %s204, %s220
      %p222 = scmp.eq.s32.totalorder %s28, 0
      %p223 = por %p221, %p222
      %s224 = ssub.s32 %s30, %s37
      %p225 = scmp.eq.s32.totalorder %s224, 0
      %s227 = sadd.s32 %s226, 1
      %s228 = scalar_select %p225, %s226, %s227
      %p231 = pneg %p225
      %p232 = scmp.eq.s32.totalorder %s22, 3
      %p233 = por %p231, %p232
      %p234 = scmp.ne.s32.totalorder %s226, %s229
      %p235 = scmp.eq.s32.totalorder %s22, 0
      %p236 = por %p234, %p235
      %p237 = scmp.ne.s32.totalorder %s226, %s229
      %p238 = scmp.eq.s32.totalorder %s27, 3
      %p239 = por %p237, %p238
      %p240 = scmp.ne.s32.totalorder %s229, %s230
      %p241 = scmp.eq.s32.totalorder %s27, 0
      %p242 = por %p240, %p241
      %p243 = scmp.ne.s32.totalorder %s229, %s230
      %p244 = scmp.eq.s32.totalorder %s28, 3
      %p245 = por %p243, %p244
      %p247 = scmp.ne.s32.totalorder %s230, %s246
      %p248 = scmp.eq.s32.totalorder %s28, 0
      %p249 = por %p247, %p248
      %s250 = ssub.s32 %s30, %s37
      %p251 = scmp.eq.s32.totalorder %s250, 0
      %s253 = sadd.s32 %s252, 1
      %s254 = scalar_select %p251, %s252, %s253
      %p257 = pneg %p251
      %p258 = scmp.eq.s32.totalorder %s22, 3
      %p259 = por %p257, %p258
      %p260 = scmp.ne.s32.totalorder %s252, %s255
      %p261 = scmp.eq.s32.totalorder %s22, 0
      %p262 = por %p260, %p261
      %p263 = scmp.ne.s32.totalorder %s252, %s255
      %p264 = scmp.eq.s32.totalorder %s27, 3
      %p265 = por %p263, %p264
      %p266 = scmp.ne.s32.totalorder %s255, %s256
      %p267 = scmp.eq.s32.totalorder %s27, 0
      %p268 = por %p266, %p267
      %p269 = scmp.ne.s32.totalorder %s255, %s256
      %p270 = scmp.eq.s32.totalorder %s28, 3
      %p271 = por %p269, %p270
      %p273 = scmp.ne.s32.totalorder %s256, %s272
      %p274 = scmp.eq.s32.totalorder %s28, 0
      %p275 = por %p273, %p274
      %s276 = ssub.s32 %s30, %s37
      %p277 = scmp.eq.s32.totalorder %s276, 0
      %s279 = sadd.s32 %s278, 1
      %s280 = scalar_select %p277, %s278, %s279
      %p283 = pneg %p277
      %p284 = scmp.eq.s32.totalorder %s22, 3
      %p285 = por %p283, %p284
      %p286 = scmp.ne.s32.totalorder %s278, %s281
      %p287 = scmp.eq.s32.totalorder %s22, 0
      %p288 = por %p286, %p287
      %p289 = scmp.ne.s32.totalorder %s278, %s281
      %p290 = scmp.eq.s32.totalorder %s27, 3
      %p291 = por %p289, %p290
      %p292 = scmp.ne.s32.totalorder %s281, %s282
      %p293 = scmp.eq.s32.totalorder %s27, 0
      %p294 = por %p292, %p293
      %p295 = scmp.ne.s32.totalorder %s281, %s282
      %p296 = scmp.eq.s32.totalorder %s28, 3
      %p297 = por %p295, %p296
      %p299 = scmp.ne.s32.totalorder %s282, %s298
      %p300 = scmp.eq.s32.totalorder %s28, 0
      %p301 = por %p299, %p300
      %s302 = ssub.s32 %s30, %s37
      %p303 = scmp.eq.s32.totalorder %s302, 0
      %s305 = sadd.s32 %s304, 1
      %s306 = scalar_select %p303, %s304, %s305
      %p309 = pneg %p303
      %p310 = scmp.eq.s32.totalorder %s22, 3
      %p311 = por %p309, %p310
      %p312 = scmp.ne.s32.totalorder %s304, %s307
      %p313 = scmp.eq.s32.totalorder %s22, 0
      %p314 = por %p312, %p313
      %p315 = scmp.ne.s32.totalorder %s304, %s307
      %p316 = scmp.eq.s32.totalorder %s27, 3
      %p317 = por %p315, %p316
      %p318 = scmp.ne.s32.totalorder %s307, %s308
      %p319 = scmp.eq.s32.totalorder %s27, 0
      %p320 = por %p318, %p319
      %p321 = scmp.ne.s32.totalorder %s307, %s308
      %p322 = scmp.eq.s32.totalorder %s28, 3
      %p323 = por %p321, %p322
      %p325 = scmp.ne.s32.totalorder %s308, %s324
      %p326 = scmp.eq.s32.totalorder %s28, 0
      %p327 = por %p325, %p326
      %s328 = ssub.s32 %s30, %s37
      %p329 = scmp.eq.s32.totalorder %s328, 0
      %s331 = sadd.s32 %s330, 1
      %s332 = scalar_select %p329, %s330, %s331
      %p335 = pneg %p329
      %p336 = scmp.eq.s32.totalorder %s22, 3
      %p337 = por %p335, %p336
      %p338 = scmp.ne.s32.totalorder %s330, %s333
      %p339 = scmp.eq.s32.totalorder %s22, 0
      %p340 = por %p338, %p339
      %p341 = scmp.ne.s32.totalorder %s330, %s333
      %p342 = scmp.eq.s32.totalorder %s27, 3
      %p343 = por %p341, %p342
      %p344 = scmp.ne.s32.totalorder %s333, %s334
      %p345 = scmp.eq.s32.totalorder %s27, 0
      %p346 = por %p344, %p345
      %p347 = scmp.ne.s32.totalorder %s333, %s334
      %p348 = scmp.eq.s32.totalorder %s28, 3
      %p349 = por %p347, %p348
      %p351 = scmp.ne.s32.totalorder %s334, %s350
      %p352 = scmp.eq.s32.totalorder %s28, 0
      %p353 = por %p351, %p352
      %s354 = ssub.s32 %s30, %s37
      %p355 = scmp.eq.s32.totalorder %s354, 0
      %s357 = sadd.s32 %s356, 1
      %s358 = scalar_select %p355, %s356, %s357
      %p361 = pneg %p355
      %p362 = scmp.eq.s32.totalorder %s22, 3
      %p363 = por %p361, %p362
      %p364 = scmp.ne.s32.totalorder %s356, %s359
      %p365 = scmp.eq.s32.totalorder %s22, 0
      %p366 = por %p364, %p365
      %p367 = scmp.ne.s32.totalorder %s356, %s359
      %p368 = scmp.eq.s32.totalorder %s27, 3
      %p369 = por %p367, %p368
      %p370 = scmp.ne.s32.totalorder %s359, %s360
      %p371 = scmp.eq.s32.totalorder %s27, 0
      %p372 = por %p370, %p371
      %p373 = scmp.ne.s32.totalorder %s359, %s360
      %p374 = scmp.eq.s32.totalorder %s28, 3
      %p375 = por %p373, %p374
      %p377 = scmp.ne.s32.totalorder %s360, %s376
      %p378 = scmp.eq.s32.totalorder %s28, 0
      %p379 = por %p377, %p378
      %s380 = ssub.s32 %s29, %s41
      %p381 = scmp.eq.s32.totalorder %s380, 0
      %s383 = sadd.s32 %s382, 1
      %s384 = scalar_select %p381, %s382, %s383
      %p387 = pneg %p381
      %p388 = scmp.eq.s32.totalorder %s22, 3
      %p389 = por %p387, %p388
      %p390 = scmp.ne.s32.totalorder %s382, %s385
      %p391 = scmp.eq.s32.totalorder %s22, 0
      %p392 = por %p390, %p391
      %p393 = scmp.ne.s32.totalorder %s382, %s385
      %p394 = scmp.eq.s32.totalorder %s27, 3
      %p395 = por %p393, %p394
      %p396 = scmp.ne.s32.totalorder %s385, %s386
      %p397 = scmp.eq.s32.totalorder %s27, 0
      %p398 = por %p396, %p397
      %p399 = scmp.ne.s32.totalorder %s385, %s386
      %p400 = scmp.eq.s32.totalorder %s28, 3
      %p401 = por %p399, %p400
      %p403 = scmp.ne.s32.totalorder %s386, %s402
      %p404 = scmp.eq.s32.totalorder %s28, 0
      %p405 = por %p403, %p404
      %p406 = scmp.le.s32.totalorder 1, %s22
      %p407 = scmp.lt.s32.totalorder %s22, 5
      %p408 = pnand %p406, %p407
      %p409 = pneg %p408
      // Predicated region
      $region9: #{tpu_custom_call.1} parent=5 // pred_check
        _
      $region10: #{tpu_custom_call.1} parent=5 // pred_check_branch
        %411 = sbr.rel (%p408) target = $region12
      $region11: #{tpu_custom_call.1} parent=5 // pred_region
        %s412 = ssub.s32 %s22, 1
      $region12: #{tpu_custom_call.1} parent=5 // pred_fallthru
        _
      %p413 = scmp.lt.s32.totalorder %s22, 4
      // Predicated region
      $region13: #{tpu_custom_call.1} parent=5 // pred_check
        %p414 = pneg %p413
      $region14: #{tpu_custom_call.1} parent=5 // pred_check_branch
        %416 = sbr.rel (%p414) target = $region16
      $region15: #{tpu_custom_call.1} parent=5 // pred_region
        // Predicated region
        $region17: #{tpu_custom_call.1} parent=15 // pred_check
          %p417 = pneg %p54
        $region18: #{tpu_custom_call.1} parent=15 // pred_check_branch
          %419 = sbr.rel (%p417) target = $region20
        $region19: #{tpu_custom_call.1} parent=15 // pred_region
          %p420 = scmp.lt.s32.totalorder %s29, 1
          %s421 = scalar_select %p420, %s29, 1
          %s422 = smul.addr %s421, 8
          %s423 = scalar_lea.vmem %s0, %s422
        $region20: #{tpu_custom_call.1} parent=15 // pred_fallthru
          _
        // Predicated region
        $region21: #{tpu_custom_call.1} parent=15 // pred_check
          %p424 = pneg %p80
        $region22: #{tpu_custom_call.1} parent=15 // pred_check_branch
          %426 = sbr.rel (%p424) target = $region24
        $region23: #{tpu_custom_call.1} parent=15 // pred_region
          %p427 = scmp.lt.s32.totalorder %s30, 1
          %s428 = scalar_select %p427, %s30, 1
          %s429 = scalar_lea.vmem %s1, %s428
        $region24: #{tpu_custom_call.1} parent=15 // pred_fallthru
          _
        // Predicated region
        $region25: #{tpu_custom_call.1} parent=15 // pred_check
          %p430 = pneg %p106
        $region26: #{tpu_custom_call.1} parent=15 // pred_check_branch
          %432 = sbr.rel (%p430) target = $region28
        $region27: #{tpu_custom_call.1} parent=15 // pred_region
          %p433 = scmp.lt.s32.totalorder %s30, 1
          %s434 = scalar_select %p433, %s30, 1
          %s435 = scalar_lea.vmem %s2, %s434
        $region28: #{tpu_custom_call.1} parent=15 // pred_fallthru
          _
        // Predicated region
        $region29: #{tpu_custom_call.1} parent=15 // pred_check
          %p436 = pneg %p132
        $region30: #{tpu_custom_call.1} parent=15 // pred_check_branch
          %438 = sbr.rel (%p436) target = $region32
        $region31: #{tpu_custom_call.1} parent=15 // pred_region
          %p439 = scmp.lt.s32.totalorder %s30, 1
          %s440 = scalar_select %p439, %s30, 1
          %s441 = smul.addr %s440, 4
          %s442 = smul.addr %s441, 4
          %s443 = scalar_lea.vmem %s3, %s442
        $region32: #{tpu_custom_call.1} parent=15 // pred_fallthru
          _
        // Predicated region
        $region33: #{tpu_custom_call.1} parent=15 // pred_check
          %p444 = pneg %p158
        $region34: #{tpu_custom_call.1} parent=15 // pred_check_branch
          %446 = sbr.rel (%p444) target = $region36
        $region35: #{tpu_custom_call.1} parent=15 // pred_region
          %p447 = scmp.lt.s32.totalorder %s30, 1
          %s448 = scalar_select %p447, %s30, 1
          %s449 = scalar_lea.vmem %s4, %s448
        $region36: #{tpu_custom_call.1} parent=15 // pred_fallthru
          _
        // Predicated region
        $region37: #{tpu_custom_call.1} parent=15 // pred_check
          %p450 = pneg %p184
        $region38: #{tpu_custom_call.1} parent=15 // pred_check_branch
          %452 = sbr.rel (%p450) target = $region40
        $region39: #{tpu_custom_call.1} parent=15 // pred_region
          %p453 = scmp.lt.s32.totalorder %s30, 1
          %s454 = scalar_select %p453, %s30, 1
          %s455 = smul.addr %s454, 4
          %s456 = smul.addr %s455, 4
          %s457 = scalar_lea.vmem %s5, %s456
        $region40: #{tpu_custom_call.1} parent=15 // pred_fallthru
          _
        // Predicated region
        $region41: #{tpu_custom_call.1} parent=15 // pred_check
          %p458 = pneg %p210
        $region42: #{tpu_custom_call.1} parent=15 // pred_check_branch
          %460 = sbr.rel (%p458) target = $region44
        $region43: #{tpu_custom_call.1} parent=15 // pred_region
          %p461 = scmp.lt.s32.totalorder %s30, 1
          %s462 = scalar_select %p461, %s30, 1
          %s463 = scalar_lea.vmem %s6, %s462
        $region44: #{tpu_custom_call.1} parent=15 // pred_fallthru
          _
        // Predicated region
        $region45: #{tpu_custom_call.1} parent=15 // pred_check
          %p464 = pneg %p236
        $region46: #{tpu_custom_call.1} parent=15 // pred_check_branch
          %466 = sbr.rel (%p464) target = $region48
        $region47: #{tpu_custom_call.1} parent=15 // pred_region
          %p467 = scmp.lt.s32.totalorder %s30, 1
          %s468 = scalar_select %p467, %s30, 1
          %s469 = scalar_lea.vmem %s7, %s468
        $region48: #{tpu_custom_call.1} parent=15 // pred_fallthru
          _
        // Predicated region
        $region49: #{tpu_custom_call.1} parent=15 // pred_check
          %p470 = pneg %p262
        $region50: #{tpu_custom_call.1} parent=15 // pred_check_branch
          %472 = sbr.rel (%p470) target = $region52
        $region51: #{tpu_custom_call.1} parent=15 // pred_region
          %p473 = scmp.lt.s32.totalorder %s30, 1
          %s474 = scalar_select %p473, %s30, 1
          %s475 = scalar_lea.vmem %s8, %s474
        $region52: #{tpu_custom_call.1} parent=15 // pred_fallthru
          _
        // Predicated region
        $region53: #{tpu_custom_call.1} parent=15 // pred_check
          %p476 = pneg %p288
        $region54: #{tpu_custom_call.1} parent=15 // pred_check_branch
          %478 = sbr.rel (%p476) target = $region56
        $region55: #{tpu_custom_call.1} parent=15 // pred_region
          %p479 = scmp.lt.s32.totalorder %s30, 1
          %s480 = scalar_select %p479, %s30, 1
          %s481 = smul.addr %s480, 4
          %s482 = smul.addr %s481, 4
          %s483 = scalar_lea.vmem %s9, %s482
        $region56: #{tpu_custom_call.1} parent=15 // pred_fallthru
          _
        // Predicated region
        $region57: #{tpu_custom_call.1} parent=15 // pred_check
          %p484 = pneg %p314
        $region58: #{tpu_custom_call.1} parent=15 // pred_check_branch
          %486 = sbr.rel (%p484) target = $region60
        $region59: #{tpu_custom_call.1} parent=15 // pred_region
          %p487 = scmp.lt.s32.totalorder %s30, 1
          %s488 = scalar_select %p487, %s30, 1
          %s489 = scalar_lea.vmem %s10, %s488
        $region60: #{tpu_custom_call.1} parent=15 // pred_fallthru
          _
        // Predicated region
        $region61: #{tpu_custom_call.1} parent=15 // pred_check
          %p490 = pneg %p340
        $region62: #{tpu_custom_call.1} parent=15 // pred_check_branch
          %492 = sbr.rel (%p490) target = $region64
        $region63: #{tpu_custom_call.1} parent=15 // pred_region
          %p493 = scmp.lt.s32.totalorder %s30, 1
          %s494 = scalar_select %p493, %s30, 1
          %s495 = smul.addr %s494, 16
          %s496 = smul.addr %s495, 4
          %s497 = scalar_lea.vmem %s11, %s496
        $region64: #{tpu_custom_call.1} parent=15 // pred_fallthru
          _
        // Predicated region
        $region65: #{tpu_custom_call.1} parent=15 // pred_check
          %p498 = pneg %p366
        $region66: #{tpu_custom_call.1} parent=15 // pred_check_branch
          %500 = sbr.rel (%p498) target = $region68
        $region67: #{tpu_custom_call.1} parent=15 // pred_region
          %p501 = scmp.lt.s32.totalorder %s30, 1
          %s502 = scalar_select %p501, %s30, 1
          %s503 = scalar_lea.vmem %s12, %s502
        $region68: #{tpu_custom_call.1} parent=15 // pred_fallthru
          _
      $region16: #{tpu_custom_call.1} parent=5 // pred_fallthru
        _
      %p504 = scmp.le.s32.totalorder 1, %s22
      %p505 = scmp.lt.s32.totalorder %s22, 5
      %p506 = pnand %p504, %p505
      %p507 = pneg %p506
      // Predicated region
      $region69: #{tpu_custom_call.1} parent=5 // pred_check
        _
      $region70: #{tpu_custom_call.1} parent=5 // pred_check_branch
        %509 = sbr.rel (%p506) target = $region72
      $region71: #{tpu_custom_call.1} parent=5 // pred_region
        %s510 = ssub.s32 %s22, 1
        %p511 = scmp.lt.s32.totalorder %s31, 1
        %s512 = scalar_select %p511, %s31, 1
        %s513 = smul.addr %s512, 8
        %s514 = scalar_lea.vmem %s0, %s513
        %p515 = pneg %p60
        %p516 = pneg %p57
        %p517 = scmp.lt.s32.totalorder %s32, 1
        %s518 = scalar_select %p517, %s32, 1
        %s519 = scalar_lea.vmem %s1, %s518
        %p520 = pneg %p86
        %p521 = pneg %p83
        %p522 = scmp.lt.s32.totalorder %s32, 1
        %s523 = scalar_select %p522, %s32, 1
        %s524 = scalar_lea.vmem %s2, %s523
        %p525 = pneg %p112
        %p526 = pneg %p109
        %p527 = scmp.lt.s32.totalorder %s32, 1
        %s528 = scalar_select %p527, %s32, 1
        %s529 = smul.addr %s528, 4
        %s530 = smul.addr %s529, 4
        %s531 = scalar_lea.vmem %s3, %s530
        %p532 = pneg %p138
        %p533 = pneg %p135
        %p534 = scmp.lt.s32.totalorder %s32, 1
        %s535 = scalar_select %p534, %s32, 1
        %s536 = scalar_lea.vmem %s4, %s535
        %p537 = pneg %p164
        %p538 = pneg %p161
        %p539 = scmp.lt.s32.totalorder %s32, 1
        %s540 = scalar_select %p539, %s32, 1
        %s541 = smul.addr %s540, 4
        %s542 = smul.addr %s541, 4
        %s543 = scalar_lea.vmem %s5, %s542
        %p544 = pneg %p190
        %p545 = pneg %p187
        %p546 = scmp.lt.s32.totalorder %s32, 1
        %s547 = scalar_select %p546, %s32, 1
        %s548 = scalar_lea.vmem %s6, %s547
        %p549 = pneg %p216
        %p550 = pneg %p213
        %p551 = scmp.lt.s32.totalorder %s32, 1
        %s552 = scalar_select %p551, %s32, 1
        %s553 = scalar_lea.vmem %s7, %s552
        %p554 = pneg %p242
        %p555 = pneg %p239
        %p556 = scmp.lt.s32.totalorder %s32, 1
        %s557 = scalar_select %p556, %s32, 1
        %s558 = scalar_lea.vmem %s8, %s557
        %p559 = pneg %p268
        %p560 = pneg %p265
        %p561 = scmp.lt.s32.totalorder %s32, 1
        %s562 = scalar_select %p561, %s32, 1
        %s563 = smul.addr %s562, 4
        %s564 = smul.addr %s563, 4
        %s565 = scalar_lea.vmem %s9, %s564
        %p566 = pneg %p294
        %p567 = pneg %p291
        %p568 = scmp.lt.s32.totalorder %s32, 1
        %s569 = scalar_select %p568, %s32, 1
        %s570 = scalar_lea.vmem %s10, %s569
        %p571 = pneg %p320
        %p572 = pneg %p317
        %p573 = scmp.lt.s32.totalorder %s32, 1
        %s574 = scalar_select %p573, %s32, 1
        %s575 = smul.addr %s574, 16
        %s576 = smul.addr %s575, 4
        %s577 = scalar_lea.vmem %s11, %s576
        %p578 = pneg %p346
        %p579 = pneg %p343
        %p580 = scmp.lt.s32.totalorder %s32, 1
        %s581 = scalar_select %p580, %s32, 1
        %s582 = scalar_lea.vmem %s12, %s581
        %p583 = pneg %p372
        %p584 = pneg %p369
        %p585 = pneg %p398
        %p586 = pneg %p395
        %s587 = sand.u32 %s385, 1
        %s588 = scalar_lea.sflag [#allocation4], %s587
        %s589 = sand.u32 %s385, 1
        %s590 = smul.addr %s589, 8
        %s591 = scalar_lea.vmem [#allocation3], %s590
        %p592 = scmp.lt.s32.totalorder %s31, 1
        %s593 = scalar_select %p592, %s31, 1
        %s594 = smul.addr %s593, 8
        %s595 = scalar_lea.vmem %s0, %s594
        %p596 = scmp.lt.s32.totalorder %s32, 1
        %s597 = scalar_select %p596, %s32, 1
        %s598 = scalar_lea.vmem %s1, %s597
        %p599 = scmp.lt.s32.totalorder %s32, 1
        %s600 = scalar_select %p599, %s32, 1
        %s601 = scalar_lea.vmem %s2, %s600
        %p602 = scmp.lt.s32.totalorder %s32, 1
        %s603 = scalar_select %p602, %s32, 1
        %s604 = smul.addr %s603, 4
        %s605 = smul.addr %s604, 4
        %s606 = scalar_lea.vmem %s3, %s605
        %p607 = scmp.lt.s32.totalorder %s32, 1
        %s608 = scalar_select %p607, %s32, 1
        %s609 = scalar_lea.vmem %s4, %s608
        %p610 = scmp.lt.s32.totalorder %s32, 1
        %s611 = scalar_select %p610, %s32, 1
        %s612 = smul.addr %s611, 4
        %s613 = smul.addr %s612, 4
        %s614 = scalar_lea.vmem %s5, %s613
        %p615 = scmp.lt.s32.totalorder %s32, 1
        %s616 = scalar_select %p615, %s32, 1
        %s617 = scalar_lea.vmem %s6, %s616
        %p618 = scmp.lt.s32.totalorder %s32, 1
        %s619 = scalar_select %p618, %s32, 1
        %s620 = scalar_lea.vmem %s7, %s619
        %p621 = scmp.lt.s32.totalorder %s32, 1
        %s622 = scalar_select %p621, %s32, 1
        %s623 = scalar_lea.vmem %s8, %s622
        %p624 = scmp.lt.s32.totalorder %s32, 1
        %s625 = scalar_select %p624, %s32, 1
        %s626 = smul.addr %s625, 4
        %s627 = smul.addr %s626, 4
        %s628 = scalar_lea.vmem %s9, %s627
        %p629 = scmp.lt.s32.totalorder %s32, 1
        %s630 = scalar_select %p629, %s32, 1
        %s631 = scalar_lea.vmem %s10, %s630
        %p632 = scmp.lt.s32.totalorder %s32, 1
        %s633 = scalar_select %p632, %s32, 1
        %s634 = smul.addr %s633, 16
        %s635 = smul.addr %s634, 4
        %s636 = scalar_lea.vmem %s11, %s635
        %p637 = scmp.lt.s32.totalorder %s32, 1
        %s638 = scalar_select %p637, %s32, 1
        %s639 = scalar_lea.vmem %s12, %s638
        %p641 = scmp.eq.s32.totalorder %s32, 0
        // Predicated region
        $region73: #{tpu_custom_call.1} parent=71 // pred_check
          %p642 = pneg %p641
        $region74: #{tpu_custom_call.1} parent=71 // pred_check_branch
          %644 = sbr.rel (%p642) target = $region76
        $region75: #{tpu_custom_call.1} parent=71 // pred_region
          %v645 = vld [vmem:[%s595] sm:$0xff]
          %vm646 = vcmask 261120
          %647 = vst.msk [vmem:[#allocation2] sm:$0xff] %vm646, %v645
        $region76: #{tpu_custom_call.1} parent=71 // pred_fallthru
          _
        %v648 = vld [vmem:[#allocation2] sm:$0xff]
        %v649 = vlaneseq
        %v650 = vshrl.u32 %v649, 7
        %v651 = vlaneseq
        %v652 = vand.u32 %v651, 127
        %vm653 = vcmp.le.s32.totalorder %v652, %v650
        %v654 = vsel %vm653, 0.0, -1e+09
        %v655 = vld [vmem:[%s598] sm:$0x1]
        %v656 = vld [vmem:[%s601] sm:$0x1]
        %vm657 = vcmask 261120
        %v658 = vsel %vm657, %v648, 0.0
        %659 = vadd.xlane.f32.xlu0 %v658
        %v660 = vpop.xlane.xlu0 %659
        %v661 = vrcp.pop 32.0
        %v662 = vmul.f32 32.0, %v661
        %v663 = vsub.f32 1.0, %v662
        %v664 = vmul.f32 %v661, %v663
        %v665 = vadd.f32 %v661, %v664
        %vm666 = vweird.f32 %v661
        %v667 = vsel %vm666, %v661, %v665
        %v668 = vmul.f32 %v660, %v667
        %v669 = vsub.f32 %v648, %v668
        %v670 = vmul.f32 %v669, %v669
        %v671 = vsel %vm657, %v670, 0.0
        %672 = vadd.xlane.f32.xlu0 %v671
        %v673 = vpop.xlane.xlu0 %672
        %v674 = vmul.f32 %v673, %v667
        %v675 = vadd.f32 %v674, 1e-05
        %v676 = vrsqrt.pop %v675
        %v677 = vmul.f32 %v676, %v675
        %v678 = vmul.f32 %v677, %v676
        %v679 = vmul.f32 0.5, %v678
        %v680 = vsub.f32 1.5, %v679
        %v681 = vmul.f32 %v676, %v680
        %vm682 = vweird.f32 %v675
        %vm683 = vweird.f32 %v676
        %vm684 = vmor %vm682, %vm683
        %v685 = vsel %vm684, %v676, %v681
        %v686 = vmul.f32 %v669, %v685
        %v688 = vperm.slane %v655, 0
        %v690 = vmul.f32 %v686, %v688
        %v692 = vperm.slane %v656, 0
        %v694 = vadd.f32 %v690, %v692
        %v695 = vpack.c.bf16 %v694, %v694
        %v696 = vld [vmem:[%s606] sm:$0xf]
        %v697 = vld [vmem:[%s606 + $0x4] sm:$0xf]
        %v698 = vld [vmem:[%s606 + $0x8] sm:$0xf]
        %v699 = vld [vmem:[%s606 + $0xc] sm:$0xf]
        %v700 = vld [vmem:[%s609] sm:$0x1]
        %v702 = vperm.slane %v700, 0
        %v708 = vunpack.c.l.b16 %v696
        %v709 = vunpack.c.l.b16 %v697
        %v710 = vunpack.c.l.b16 %v698
        %v711 = vunpack.c.l.b16 %v699
        %v712 = vpack.c.b16 %v709, %v708
        %v713 = vpack.c.b16 %v711, %v710
        %v717 = vsel %vm657, %v695, 0
        %719 = vmatpush.bf16.msra.mxu0 0
        %720 = vmatpush.bf16.msra.mxu0 0
        %721 = vmatpush.bf16.msra.mxu0 0
        %722 = vmatpush.bf16.msra.mxu0 0
        %723 = vmatpush.bf16.msra.mxu0 0
        %724 = vmatpush.bf16.msra.mxu0 0
        %725 = vmatpush.bf16.msra.mxu0 %v713
        %726 = vmatpush.bf16.msra.mxu0 %v712
        %727 = vmatmul.bf16.gmra.mxu0 %v717
        %v728 = vpop.f32.mrf.mxu0
        %v729 = vadd.f32 %v702, %v728
        %v730 = vpop.f32.mrf.mxu0
        %731 = vdwg.mxu0
        %v732 = vmul.f32 %v729, 0.35355338
        %v733 = vpack.c.bf16 %v732, %v732
        %v734 = vpack.c.bf16 %v729, %v729
        %736 = vrot.lane.b32.xlu0 %v734, 96
        %v737 = vpop.permute.xlu0 %736
        %vm738 = vcmask 64512
        %v740 = vsel %vm738, %v733, 0
        %v743 = vsel %vm738, %v737, 0
        %745 = vmatpush.bf16.xpose.msra.mxu0 0
        %746 = vmatpush.bf16.xpose.msra.mxu0 0
        %747 = vmatpush.bf16.xpose.msra.mxu0 0
        %748 = vmatpush.bf16.xpose.msra.mxu0 0
        %749 = vmatpush.bf16.xpose.msra.mxu0 0
        %750 = vmatpush.bf16.xpose.msra.mxu0 0
        %751 = vmatpush.bf16.xpose.msra.mxu0 0
        %752 = vmatpush.bf16.xpose.msra.mxu0 %v743
        %753 = vmatmul.bf16.gmra.mxu0 %v740
        %v754 = vpop.f32.mrf.mxu0
        %v755 = vadd.f32 %v654, %v754
        %v756 = vpop.f32.mrf.mxu0
        %757 = vdwg.mxu0
        %v758 = vsel %vm738, %v755, -inf
        %759 = vmax.xlane.f32.xlu0 %v758
        %v760 = vpop.xlane.xlu0 %759
        %v761 = vsub.f32 %v755, %v760
        %v762 = vmul.f32 %v761, 1.442695
        %v763 = vpow.pop %v762
        %v764 = vsel %vm738, %v763, 0.0
        %765 = vadd.xlane.f32.xlu0 %v764
        %v766 = vpop.xlane.xlu0 %765
        %v767 = vrcp.pop %v766
        %v768 = vmul.f32 %v763, %v767
        %v769 = vpack.c.bf16 %v768, %v768
        %770 = vrot.lane.b32.xlu0 %v734, 64
        %v771 = vpop.permute.xlu0 %770
        %v773 = vsel %vm738, %v769, 0
        %vm775 = vcmask 1043456
        %v777 = vsel %vm775, %v771, 0
        %779 = vmatpush.bf16.msra.mxu0 0
        %780 = vmatpush.bf16.msra.mxu0 0
        %781 = vmatpush.bf16.msra.mxu0 0
        %782 = vmatpush.bf16.msra.mxu0 0
        %783 = vmatpush.bf16.msra.mxu0 0
        %784 = vmatpush.bf16.msra.mxu0 0
        %785 = vmatpush.bf16.msra.mxu0 0
        %786 = vmatpush.bf16.msra.mxu0 %v777
        %787 = vmatmul.bf16.gmra.mxu0 %v773
        %v788 = vpop.f32.mrf.mxu0
        %v789 = vadd.f32 0.0, %v788
        %v790 = vpop.f32.mrf.mxu0
        %791 = vdwg.mxu0
        %v792 = vpack.c.bf16 %v789, %v789
        %v793 = vld [vmem:[%s614] sm:$0xf]
        %795 = vrot.lane.b32.xlu0 %v733, 120
        %v796 = vpop.permute.xlu0 %795
        %797 = vrot.lane.b32.xlu0 %v734, 88
        %v798 = vpop.permute.xlu0 %797
        %v800 = vsel %vm738, %v796, 0
        %v803 = vsel %vm738, %v798, 0
        %805 = vmatpush.bf16.xpose.msra.mxu0 0
        %806 = vmatpush.bf16.xpose.msra.mxu0 0
        %807 = vmatpush.bf16.xpose.msra.mxu0 0
        %808 = vmatpush.bf16.xpose.msra.mxu0 0
        %809 = vmatpush.bf16.xpose.msra.mxu0 0
        %810 = vmatpush.bf16.xpose.msra.mxu0 0
        %811 = vmatpush.bf16.xpose.msra.mxu0 0
        %812 = vmatpush.bf16.xpose.msra.mxu0 %v803
        %813 = vmatmul.bf16.gmra.mxu0 %v800
        %v814 = vpop.f32.mrf.mxu0
        %v815 = vadd.f32 %v654, %v814
        %v816 = vpop.f32.mrf.mxu0
        %817 = vdwg.mxu0
        %v818 = vsel %vm738, %v815, -inf
        %819 = vmax.xlane.f32.xlu0 %v818
        %v820 = vpop.xlane.xlu0 %819
        %v821 = vsub.f32 %v815, %v820
        %v822 = vmul.f32 %v821, 1.442695
        %v823 = vpow.pop %v822
        %v824 = vsel %vm738, %v823, 0.0
        %825 = vadd.xlane.f32.xlu0 %v824
        %v826 = vpop.xlane.xlu0 %825
        %v827 = vrcp.pop %v826
        %v828 = vmul.f32 %v823, %v827
        %v829 = vpack.c.bf16 %v828, %v828
        %830 = vrot.lane.b32.xlu0 %v734, 56
        %v831 = vpop.permute.xlu0 %830
        %v833 = vsel %vm738, %v829, 0
        %v836 = vsel %vm775, %v831, 0
        %838 = vmatpush.bf16.msra.mxu0 0
        %839 = vmatpush.bf16.msra.mxu0 0
        %840 = vmatpush.bf16.msra.mxu0 0
        %841 = vmatpush.bf16.msra.mxu0 0
        %842 = vmatpush.bf16.msra.mxu0 0
        %843 = vmatpush.bf16.msra.mxu0 0
        %844 = vmatpush.bf16.msra.mxu0 0
        %845 = vmatpush.bf16.msra.mxu0 %v836
        %846 = vmatmul.bf16.gmra.mxu0 %v833
        %v847 = vpop.f32.mrf.mxu0
        %v848 = vadd.f32 0.0, %v847
        %v849 = vpop.f32.mrf.mxu0
        %850 = vdwg.mxu0
        %v851 = vpack.c.bf16 %v848, %v848
        %s852 = scalar_lea.vmem %s614, 4
        %v853 = vld [vmem:[%s852] sm:$0xf]
        %v855 = vsel %vm738, %v851, 0
        %v858 = vsel %vm775, %v853, 0
        %860 = vmatpush.bf16.msra.mxu0 0
        %861 = vmatpush.bf16.msra.mxu0 0
        %862 = vmatpush.bf16.msra.mxu0 0
        %863 = vmatpush.bf16.msra.mxu0 0
        %864 = vmatpush.bf16.msra.mxu0 0
        %865 = vmatpush.bf16.msra.mxu0 0
        %866 = vmatpush.bf16.msra.mxu0 0
        %867 = vmatpush.bf16.msra.mxu0 %v858
        %868 = vmatmul.bf16.gmra.mxu0 %v855
        %v869 = vpop.f32.mrf.mxu0
        %v870 = vadd.f32 0.0, %v869
        %v871 = vpop.f32.mrf.mxu0
        %872 = vdwg.mxu0
        %v874 = vsel %vm738, %v792, 0
        %v877 = vsel %vm775, %v793, 0
        %879 = vmatpush.bf16.msra.mxu0 0
        %880 = vmatpush.bf16.msra.mxu0 0
        %881 = vmatpush.bf16.msra.mxu0 0
        %882 = vmatpush.bf16.msra.mxu0 0
        %883 = vmatpush.bf16.msra.mxu0 0
        %884 = vmatpush.bf16.msra.mxu0 0
        %885 = vmatpush.bf16.msra.mxu0 0
        %886 = vmatpush.bf16.msra.mxu0 %v877
        %887 = vmatmul.bf16.gmra.mxu0 %v874
        %v888 = vpop.f32.mrf.mxu0
        %v889 = vadd.f32 %v870, %v888
        %v890 = vpop.f32.mrf.mxu0
        %891 = vdwg.mxu0
        %892 = vrot.lane.b32.xlu0 %v733, 112
        %v893 = vpop.permute.xlu0 %892
        %894 = vrot.lane.b32.xlu0 %v734, 80
        %v895 = vpop.permute.xlu0 %894
        %v897 = vsel %vm738, %v893, 0
        %v900 = vsel %vm738, %v895, 0
        %902 = vmatpush.bf16.xpose.msra.mxu0 0
        %903 = vmatpush.bf16.xpose.msra.mxu0 0
        %904 = vmatpush.bf16.xpose.msra.mxu0 0
        %905 = vmatpush.bf16.xpose.msra.mxu0 0
        %906 = vmatpush.bf16.xpose.msra.mxu0 0
        %907 = vmatpush.bf16.xpose.msra.mxu0 0
        %908 = vmatpush.bf16.xpose.msra.mxu0 0
        %909 = vmatpush.bf16.xpose.msra.mxu0 %v900
        %910 = vmatmul.bf16.gmra.mxu0 %v897
        %v911 = vpop.f32.mrf.mxu0
        %v912 = vadd.f32 %v654, %v911
        %v913 = vpop.f32.mrf.mxu0
        %914 = vdwg.mxu0
        %v915 = vsel %vm738, %v912, -inf
        %916 = vmax.xlane.f32.xlu0 %v915
        %v917 = vpop.xlane.xlu0 %916
        %v918 = vsub.f32 %v912, %v917
        %v919 = vmul.f32 %v918, 1.442695
        %v920 = vpow.pop %v919
        %v921 = vsel %vm738, %v920, 0.0
        %922 = vadd.xlane.f32.xlu0 %v921
        %v923 = vpop.xlane.xlu0 %922
        %v924 = vrcp.pop %v923
        %v925 = vmul.f32 %v920, %v924
        %v926 = vpack.c.bf16 %v925, %v925
        %927 = vrot.lane.b32.xlu0 %v734, 48
        %v928 = vpop.permute.xlu0 %927
        %v930 = vsel %vm738, %v926, 0
        %v933 = vsel %vm775, %v928, 0
        %935 = vmatpush.bf16.msra.mxu0 0
        %936 = vmatpush.bf16.msra.mxu0 0
        %937 = vmatpush.bf16.msra.mxu0 0
        %938 = vmatpush.bf16.msra.mxu0 0
        %939 = vmatpush.bf16.msra.mxu0 0
        %940 = vmatpush.bf16.msra.mxu0 0
        %941 = vmatpush.bf16.msra.mxu0 0
        %942 = vmatpush.bf16.msra.mxu0 %v933
        %943 = vmatmul.bf16.gmra.mxu0 %v930
        %v944 = vpop.f32.mrf.mxu0
        %v945 = vadd.f32 0.0, %v944
        %v946 = vpop.f32.mrf.mxu0
        %947 = vdwg.mxu0
        %v948 = vpack.c.bf16 %v945, %v945
        %s949 = scalar_lea.vmem %s614, 8
        %v950 = vld [vmem:[%s949] sm:$0xf]
        %v952 = vsel %vm738, %v948, 0
        %v955 = vsel %vm775, %v950, 0
        %957 = vmatpush.bf16.msra.mxu0 0
        %958 = vmatpush.bf16.msra.mxu0 0
        %959 = vmatpush.bf16.msra.mxu0 0
        %960 = vmatpush.bf16.msra.mxu0 0
        %961 = vmatpush.bf16.msra.mxu0 0
        %962 = vmatpush.bf16.msra.mxu0 0
        %963 = vmatpush.bf16.msra.mxu0 0
        %964 = vmatpush.bf16.msra.mxu0 %v955
        %965 = vmatmul.bf16.gmra.mxu0 %v952
        %v966 = vpop.f32.mrf.mxu0
        %v967 = vadd.f32 0.0, %v966
        %v968 = vpop.f32.mrf.mxu0
        %969 = vdwg.mxu0
        %v970 = vadd.f32 %v889, %v967
        %971 = vrot.lane.b32.xlu0 %v733, 104
        %v972 = vpop.permute.xlu0 %971
        %973 = vrot.lane.b32.xlu0 %v734, 72
        %v974 = vpop.permute.xlu0 %973
        %v976 = vsel %vm738, %v972, 0
        %v979 = vsel %vm738, %v974, 0
        %981 = vmatpush.bf16.xpose.msra.mxu0 0
        %982 = vmatpush.bf16.xpose.msra.mxu0 0
        %983 = vmatpush.bf16.xpose.msra.mxu0 0
        %984 = vmatpush.bf16.xpose.msra.mxu0 0
        %985 = vmatpush.bf16.xpose.msra.mxu0 0
        %986 = vmatpush.bf16.xpose.msra.mxu0 0
        %987 = vmatpush.bf16.xpose.msra.mxu0 0
        %988 = vmatpush.bf16.xpose.msra.mxu0 %v979
        %989 = vmatmul.bf16.gmra.mxu0 %v976
        %v990 = vpop.f32.mrf.mxu0
        %v991 = vadd.f32 %v654, %v990
        %v992 = vpop.f32.mrf.mxu0
        %993 = vdwg.mxu0
        %v994 = vsel %vm738, %v991, -inf
        %995 = vmax.xlane.f32.xlu0 %v994
        %v996 = vpop.xlane.xlu0 %995
        %v997 = vsub.f32 %v991, %v996
        %v998 = vmul.f32 %v997, 1.442695
        %v999 = vpow.pop %v998
        %v1000 = vsel %vm738, %v999, 0.0
        %1001 = vadd.xlane.f32.xlu0 %v1000
        %v1002 = vpop.xlane.xlu0 %1001
        %v1003 = vrcp.pop %v1002
        %v1004 = vmul.f32 %v999, %v1003
        %v1005 = vpack.c.bf16 %v1004, %v1004
        %1006 = vrot.lane.b32.xlu0 %v734, 40
        %v1007 = vpop.permute.xlu0 %1006
        %v1009 = vsel %vm738, %v1005, 0
        %v1012 = vsel %vm775, %v1007, 0
        %1014 = vmatpush.bf16.msra.mxu0 0
        %1015 = vmatpush.bf16.msra.mxu0 0
        %1016 = vmatpush.bf16.msra.mxu0 0
        %1017 = vmatpush.bf16.msra.mxu0 0
        %1018 = vmatpush.bf16.msra.mxu0 0
        %1019 = vmatpush.bf16.msra.mxu0 0
        %1020 = vmatpush.bf16.msra.mxu0 0
        %1021 = vmatpush.bf16.msra.mxu0 %v1012
        %1022 = vmatmul.bf16.gmra.mxu0 %v1009
        %v1023 = vpop.f32.mrf.mxu0
        %v1024 = vadd.f32 0.0, %v1023
        %v1025 = vpop.f32.mrf.mxu0
        %1026 = vdwg.mxu0
        %v1027 = vpack.c.bf16 %v1024, %v1024
        %s1028 = scalar_lea.vmem %s614, 12
        %v1029 = vld [vmem:[%s1028] sm:$0xf]
        %v1031 = vsel %vm738, %v1027, 0
        %v1034 = vsel %vm775, %v1029, 0
        %1036 = vmatpush.bf16.msra.mxu0 0
        %1037 = vmatpush.bf16.msra.mxu0 0
        %1038 = vmatpush.bf16.msra.mxu0 0
        %1039 = vmatpush.bf16.msra.mxu0 0
        %1040 = vmatpush.bf16.msra.mxu0 0
        %1041 = vmatpush.bf16.msra.mxu0 0
        %1042 = vmatpush.bf16.msra.mxu0 0
        %1043 = vmatpush.bf16.msra.mxu0 %v1034
        %1044 = vmatmul.bf16.gmra.mxu0 %v1031
        %v1045 = vpop.f32.mrf.mxu0
        %v1046 = vadd.f32 0.0, %v1045
        %v1047 = vpop.f32.mrf.mxu0
        %1048 = vdwg.mxu0
        %v1049 = vadd.f32 %v970, %v1046
        %v1050 = vadd.f32 %v648, %v1049
        %v1051 = vld [vmem:[%s617] sm:$0x1]
        %v1053 = vperm.slane %v1051, 0
        %v1055 = vadd.f32 %v1050, %v1053
        %v1056 = vld [vmem:[%s620] sm:$0x1]
        %v1057 = vld [vmem:[%s623] sm:$0x1]
        %v1058 = vsel %vm657, %v1055, 0.0
        %1059 = vadd.xlane.f32.xlu0 %v1058
        %v1060 = vpop.xlane.xlu0 %1059
        %v1061 = vmul.f32 %v1060, %v667
        %v1062 = vsub.f32 %v1055, %v1061
        %v1063 = vmul.f32 %v1062, %v1062
        %v1064 = vsel %vm657, %v1063, 0.0
        %1065 = vadd.xlane.f32.xlu0 %v1064
        %v1066 = vpop.xlane.xlu0 %1065
        %v1067 = vmul.f32 %v1066, %v667
        %v1068 = vadd.f32 %v1067, 1e-05
        %v1069 = vrsqrt.pop %v1068
        %v1070 = vmul.f32 %v1069, %v1068
        %v1071 = vmul.f32 %v1070, %v1069
        %v1072 = vmul.f32 0.5, %v1071
        %v1073 = vsub.f32 1.5, %v1072
        %v1074 = vmul.f32 %v1069, %v1073
        %vm1075 = vweird.f32 %v1068
        %vm1076 = vweird.f32 %v1069
        %vm1077 = vmor %vm1075, %vm1076
        %v1078 = vsel %vm1077, %v1069, %v1074
        %v1079 = vmul.f32 %v1062, %v1078
        %v1081 = vperm.slane %v1056, 0
        %v1083 = vmul.f32 %v1079, %v1081
        %v1085 = vperm.slane %v1057, 0
        %v1087 = vadd.f32 %v1083, %v1085
        %v1088 = vpack.c.bf16 %v1087, %v1087
        %v1089 = vld [vmem:[%s628] sm:$0xf]
        %v1090 = vld [vmem:[%s628 + $0x4] sm:$0xf]
        %v1091 = vld [vmem:[%s628 + $0x8] sm:$0xf]
        %v1092 = vld [vmem:[%s628 + $0xc] sm:$0xf]
        %v1093 = vld [vmem:[%s631] sm:$0x1]
        %v1095 = vperm.slane %v1093, 0
        %v1101 = vunpack.c.l.b16 %v1089
        %v1102 = vunpack.c.l.b16 %v1090
        %v1103 = vunpack.c.l.b16 %v1091
        %v1104 = vunpack.c.l.b16 %v1092
        %v1105 = vpack.c.b16 %v1102, %v1101
        %v1106 = vpack.c.b16 %v1104, %v1103
        %v1110 = vsel %vm657, %v1088, 0
        %1112 = vmatpush.bf16.msra.mxu0 0
        %1113 = vmatpush.bf16.msra.mxu0 0
        %1114 = vmatpush.bf16.msra.mxu0 0
        %1115 = vmatpush.bf16.msra.mxu0 0
        %1116 = vmatpush.bf16.msra.mxu0 0
        %1117 = vmatpush.bf16.msra.mxu0 0
        %1118 = vmatpush.bf16.msra.mxu0 %v1106
        %1119 = vmatpush.bf16.msra.mxu0 %v1105
        %1120 = vmatmul.bf16.gmra.mxu0 %v1110
        %v1121 = vpop.f32.mrf.mxu0
        %v1122 = vadd.f32 %v1095, %v1121
        %v1123 = vpop.f32.mrf.mxu0
        %1124 = vdwg.mxu0
        %v1125 = vmul.f32 %v1122, 1.702
        %v1126 = vxor.u32 %v1125, 2147483648
        %v1127 = vmul.f32 %v1126, 1.442695
        %v1128 = vpow.pop %v1127
        %v1129 = vadd.f32 %v1128, 1.0
        %v1130 = vrcp.pop %v1129
        %v1131 = vmul.f32 %v1129, %v1130
        %v1132 = vsub.f32 1.0, %v1131
        %v1133 = vmul.f32 %v1130, %v1132
        %v1134 = vadd.f32 %v1130, %v1133
        %vm1135 = vweird.f32 %v1129
        %vm1136 = vweird.f32 %v1130
        %vm1137 = vmor %vm1135, %vm1136
        %v1138 = vsel %vm1137, %v1130, %v1134
        %v1139 = vand.u32 2147483647, %v1129
        %vm1140 = vcmp.eq.f32.partialorder %v1139, 8.507059e+37
        %v1141 = vand.u32 %v1129, 2147483648
        %v1142 = vor.u32 1.1754944e-38, %v1141
        %v1143 = vsel %vm1140, %v1142, %v1138
        %v1144 = vmul.f32 1.0, %v1143
        %v1145 = vmul.f32 %v1122, %v1144
        %v1146 = vpack.c.bf16 %v1145, %v1145
        %v1147 = vld [vmem:[%s636] sm:$0xf]
        %v1148 = vld [vmem:[%s636 + $0x4] sm:$0xf]
        %v1149 = vld [vmem:[%s636 + $0x8] sm:$0xf]
        %v1150 = vld [vmem:[%s636 + $0xc] sm:$0xf]
        %v1151 = vld [vmem:[%s636 + $0x10] sm:$0xf]
        %v1152 = vld [vmem:[%s636 + $0x14] sm:$0xf]
        %v1153 = vld [vmem:[%s636 + $0x18] sm:$0xf]
        %v1154 = vld [vmem:[%s636 + $0x1c] sm:$0xf]
        %v1155 = vld [vmem:[%s636 + $0x20] sm:$0xf]
        %v1156 = vld [vmem:[%s636 + $0x24] sm:$0xf]
        %v1157 = vld [vmem:[%s636 + $0x28] sm:$0xf]
        %v1158 = vld [vmem:[%s636 + $0x2c] sm:$0xf]
        %v1159 = vld [vmem:[%s636 + $0x30] sm:$0xf]
        %v1160 = vld [vmem:[%s636 + $0x34] sm:$0xf]
        %v1161 = vld [vmem:[%s636 + $0x38] sm:$0xf]
        %v1162 = vld [vmem:[%s636 + $0x3c] sm:$0xf]
        %v1163 = vld [vmem:[%s639] sm:$0x1]
        %v1165 = vperm.slane %v1163, 0
        %v1183 = vunpack.c.l.b16 %v1147
        %v1184 = vunpack.c.l.b16 %v1148
        %v1185 = vunpack.c.l.b16 %v1149
        %v1186 = vunpack.c.l.b16 %v1150
        %v1187 = vunpack.c.l.b16 %v1151
        %v1188 = vunpack.c.l.b16 %v1152
        %v1189 = vunpack.c.l.b16 %v1153
        %v1190 = vunpack.c.l.b16 %v1154
        %v1191 = vunpack.c.l.b16 %v1155
        %v1192 = vunpack.c.l.b16 %v1156
        %v1193 = vunpack.c.l.b16 %v1157
        %v1194 = vunpack.c.l.b16 %v1158
        %v1195 = vunpack.c.l.b16 %v1159
        %v1196 = vunpack.c.l.b16 %v1160
        %v1197 = vunpack.c.l.b16 %v1161
        %v1198 = vunpack.c.l.b16 %v1162
        %v1199 = vpack.c.b16 %v1184, %v1183
        %v1200 = vpack.c.b16 %v1186, %v1185
        %v1201 = vpack.c.b16 %v1188, %v1187
        %v1202 = vpack.c.b16 %v1190, %v1189
        %v1203 = vpack.c.b16 %v1192, %v1191
        %v1204 = vpack.c.b16 %v1194, %v1193
        %v1205 = vpack.c.b16 %v1196, %v1195
        %v1206 = vpack.c.b16 %v1198, %v1197
        %1215 = vmatpush.bf16.msra.mxu0 %v1206
        %1216 = vmatpush.bf16.msra.mxu0 %v1205
        %1217 = vmatpush.bf16.msra.mxu0 %v1204
        %1218 = vmatpush.bf16.msra.mxu0 %v1203
        %1219 = vmatpush.bf16.msra.mxu0 %v1202
        %1220 = vmatpush.bf16.msra.mxu0 %v1201
        %1221 = vmatpush.bf16.msra.mxu0 %v1200
        %1222 = vmatpush.bf16.msra.mxu0 %v1199
        %1223 = vmatmul.bf16.gmra.mxu0 %v1146
        %v1224 = vpop.f32.mrf.mxu0
        %v1225 = vadd.f32 %v1165, %v1224
        %v1226 = vpop.f32.mrf.mxu0
        %1227 = vdwg.mxu0
        %v1228 = vadd.f32 %v1055, %v1225
        %1229 = vst.msk [vmem:[#allocation2] sm:$0xff] %vm657, %v1228
        %p1230 = scmp.eq.s32.totalorder %s32, 1
        // Predicated region
        $region77: #{tpu_custom_call.1} parent=71 // pred_check
          %p1231 = pneg %p1230
        $region78: #{tpu_custom_call.1} parent=71 // pred_check_branch
          %1233 = sbr.rel (%p1231) target = $region80
        $region79: #{tpu_custom_call.1} parent=71 // pred_region
          %1234 = vst.msk [vmem:[%s591] sm:$0xff] %vm657, %v1228
        $region80: #{tpu_custom_call.1} parent=71 // pred_fallthru
          _
        %s1235 = sand.u32 %s385, 1
        %s1236 = scalar_lea.sflag [#allocation4], %s1235
        %s1237 = sand.u32 %s385, 1
        %s1238 = smul.addr %s1237, 8
        %s1239 = scalar_lea.vmem [#allocation3], %s1238
        // Predicated region
        $region81: #{tpu_custom_call.1} parent=71 // pred_check
          %p1240 = pneg %p395
        $region82: #{tpu_custom_call.1} parent=71 // pred_check_branch
          %1242 = sbr.rel (%p1240) target = $region84
        $region83: #{tpu_custom_call.1} parent=71 // pred_region
          %1244 = vsyncadd %s1236, 0
          %s1245 = smul.addr %s31, 8
          %s1246 = scalar_lea.hbm %s13, %s1245
          %s1248 = sshll.u32 %s1239, 4
          %s1249 = int_to_ptr.vmem [resolvable:$true] %s1248
          %s1250 = sshll.u32 %s1246, 4
          %s1251 = int_to_ptr.hbm [resolvable:$true] %s1250
          %1253 = dma.vmem_to_hbm [thread:$0]  %s1249, 128, %s1251, %s1236
        $region84: #{tpu_custom_call.1} parent=71 // pred_fallthru
          _
      $region72: #{tpu_custom_call.1} parent=5 // pred_fallthru
        _
      %p1254 = scmp.le.s32.totalorder 2, %s22
      // Predicated region
      $region85: #{tpu_custom_call.1} parent=5 // pred_check
        %p1255 = pneg %p1254
      $region86: #{tpu_custom_call.1} parent=5 // pred_check_branch
        %1257 = sbr.rel (%p1255) target = $region88
      $region87: #{tpu_custom_call.1} parent=5 // pred_region
        %s1258 = ssub.s32 %s22, 2
        // Predicated region
        $region89: #{tpu_custom_call.1} parent=87 // pred_check
          %p1259 = pneg %p401
        $region90: #{tpu_custom_call.1} parent=87 // pred_check_branch
          %1261 = sbr.rel (%p1259) target = $region92
        $region91: #{tpu_custom_call.1} parent=87 // pred_region
          %s1262 = sand.u32 %s386, 1
          %s1263 = scalar_lea.sflag [#allocation4], %s1262
          %s1264 = sand.u32 %s386, 1
          %s1265 = smul.addr %s1264, 8
          %s1266 = scalar_lea.vmem [#allocation3], %s1265
          %1268 = dma.done %s1263, 128
        $region92: #{tpu_custom_call.1} parent=87 // pred_fallthru
          _
      $region88: #{tpu_custom_call.1} parent=5 // pred_fallthru
        _
    $region6: #{tpu_custom_call.1} parent=1 // loop_footer
      %s26 = sadd.s32 1, %s22
    $region7: #{tpu_custom_call.1} parent=1 // loop_footer_branch
      %21 = sbr.rel target = $region3
    $region8: #{tpu_custom_call.1} parent=1 // loop_exit
      _
    %1269 = vsyncpa [#allocation4], 1
    %s1270 = scalar_lea.sflag [#allocation4], 1
    %1271 = vsyncpa %s1270, 1

</llo_original>
